<compile_context>
chip_gen: v7x
topology: tpu7x:2x2x1
jax: 0.10.0
libtpu: 0.0.40
codegen_flags: <defaults>
</compile_context>

<pallas_src>
import functools
import math

import jax
import jax.numpy as jnp
from jax.experimental import pallas as pl
from jax.experimental.pallas import tpu as pltpu

NEG_INF = -1e30
_DOT_LAST_LAST = (((1,), (1,)), ((), ()))  # contract lhs last dim with rhs last dim


def _compiler_params(dimension_semantics):
    return pltpu.CompilerParams(
        dimension_semantics=dimension_semantics,
        vmem_limit_bytes=48 * 1024 * 1024,
    )


# ----------------------------------------------------------------------------
# Kernel 1: fused QKV projection, writing head-major [B, nh, S, d] outputs.
#   q/k/v = x @ W_t + b   with W_t = W.T (pre-transposed [in, out], bf16),
#   1/sqrt(d) already folded into the query weights/bias.
# ----------------------------------------------------------------------------
def _qkv_proj_kernel(x_ref, wq_ref, wk_ref, wv_ref, bq_ref, bk_ref, bv_ref,
                     q_out, k_out, v_out, *, num_heads, head_dim):
    x = x_ref[...]                                           # (tm, H) bf16
    for w_ref, b_ref, o_ref in ((wq_ref, bq_ref, q_out),
                                (wk_ref, bk_ref, k_out),
                                (wv_ref, bv_ref, v_out)):
        y = jnp.dot(x, w_ref[...],
                    preferred_element_type=jnp.float32) + b_ref[...]   # (tm, H) f32
        y = y.astype(o_ref.dtype)                            # bf16
        # Head-major scatter: static lane slice of the result, stored on a major
        # dim of the output block (no XLA transpose between the two kernels).
        for h in range(num_heads):
            o_ref[0, h, :, :] = y[:, h * head_dim:(h + 1) * head_dim]


def qkv_projection(x2d, wq_t, bq, wk_t, bk, wv_t, bv, *,
                   batch, seq, num_heads, tm=None):
    M, H = x2d.shape
    assert M == batch * seq
    head_dim = H // num_heads
    if tm is None:
        tm = min(seq, 512)                 # review: larger row tile (fewer grid steps)
    assert seq % tm == 0
    s_blocks = seq // tm
    grid = (batch, s_blocks)

    x_spec = pl.BlockSpec((tm, H), lambda b, i: (b * s_blocks + i, 0))
    w_spec = pl.BlockSpec((H, H), lambda b, i: (0, 0))       # grid-invariant
    b_spec = pl.BlockSpec((1, H), lambda b, i: (0, 0))
    out_spec = pl.BlockSpec((1, num_heads, tm, head_dim), lambda b, i: (b, 0, i, 0))
    out_sds = jax.ShapeDtypeStruct((batch, num_heads, seq, head_dim), jnp.bfloat16)

    kernel = functools.partial(_qkv_proj_kernel,
                               num_heads=num_heads, head_dim=head_dim)
    return pl.pallas_call(
        kernel,
        out_shape=(out_sds, out_sds, out_sds),
        grid_spec=pltpu.PrefetchScalarGridSpec(
            num_scalar_prefetch=0,
            grid=grid,
            in_specs=[x_spec, w_spec, w_spec, w_spec, b_spec, b_spec, b_spec],
            out_specs=(out_spec, out_spec, out_spec),
        ),
        compiler_params=_compiler_params(("parallel", "parallel")),
    )(x2d, wq_t, wk_t, wv_t, bq, bk, bv)


# ----------------------------------------------------------------------------
# Kernel 2: flash-attention-style online softmax, all heads per grid step.
#   grid = (B, S//tq, S//tk); KV axis is sequential ("arbitrary").
#   Q/K/V are head-major [B, nh, S, d] so per-head slices are free major-dim views.
#   Output is assembled in [B, S, nh, d] (free reshape to [B, S, H]).
# ----------------------------------------------------------------------------
def _attn_kernel(q_ref, k_ref, v_ref, mask_ref, o_ref, m_scr, l_scr, acc_scr,
                 *, num_heads):
    ki = pl.program_id(2)

    @pl.when(ki == 0)
    def _init():
        m_scr[...] = jnp.full_like(m_scr, NEG_INF)
        l_scr[...] = jnp.zeros_like(l_scr)
        acc_scr[...] = jnp.zeros_like(acc_scr)

    mask = mask_ref[0]                                       # (1, tk) additive mask

    for h in range(num_heads):                               # static unroll
        q = q_ref[0, h]                                      # (tq, d) bf16
        k = k_ref[0, h]                                      # (tk, d) bf16
        v = v_ref[0, h]                                      # (tk, d) bf16

        # scores = q @ k^T (scale already folded into the query projection)
        s = jax.lax.dot_general(q, k, _DOT_LAST_LAST,
                                preferred_element_type=jnp.float32)   # (tq, tk)
        s = s + mask                                         # broadcast over q rows

        m_prev = m_scr[h]
        m_new = jnp.maximum(m_prev, jnp.max(s, axis=-1, keepdims=True))
        alpha = jnp.exp(m_prev - m_new)
        p = jnp.exp(s - m_new)
        l_scr[h] = alpha * l_scr[h] + jnp.sum(p, axis=-1, keepdims=True)
        acc_scr[h] = alpha * acc_scr[h] + jnp.dot(
            p.astype(v.dtype), v, preferred_element_type=jnp.float32)
        m_scr[h] = m_new
        # TODO(synk): attention-prob dropout (training mode) would go here.

    @pl.when(ki == pl.num_programs(2) - 1)
    def _finalize():
        for h in range(num_heads):
            inv_l = pl.reciprocal(l_scr[h], approx=True)     # EUP, not VALU divide
            o_ref[0, :, h, :] = (acc_scr[h] * inv_l).astype(o_ref.dtype)


def multi_head_attention(q4, k4, v4, mask_b1s, *, tq=None, tk=None,
                         out_dtype=jnp.float32):
    B, nh, S, d = q4.shape
    if tq is None:
        tq = min(S, 256)                   # review: 256-deep tiles (sweep per chip)
    if tk is None:
        tk = min(S, 256)
    assert S % tq == 0 and S % tk == 0
    grid = (B, S // tq, S // tk)

    kernel = functools.partial(_attn_kernel, num_heads=nh)
    return pl.pallas_call(
        kernel,
        out_shape=jax.ShapeDtypeStruct((B, S, nh, d), out_dtype),
        grid_spec=pltpu.PrefetchScalarGridSpec(
            num_scalar_prefetch=0,
            grid=grid,
            in_specs=[
                pl.BlockSpec((1, nh, tq, d), lambda b, qi, ki: (b, 0, qi, 0)),  # Q
                pl.BlockSpec((1, nh, tk, d), lambda b, qi, ki: (b, 0, ki, 0)),  # K
                pl.BlockSpec((1, nh, tk, d), lambda b, qi, ki: (b, 0, ki, 0)),  # V
                pl.BlockSpec((1, 1, tk), lambda b, qi, ki: (b, 0, ki)),         # mask
            ],
            out_specs=pl.BlockSpec((1, tq, nh, d), lambda b, qi, ki: (b, qi, 0, 0)),
            scratch_shapes=[
                pltpu.VMEM((nh, tq, 1), jnp.float32),   # running max m
                pltpu.VMEM((nh, tq, 1), jnp.float32),   # running denom l
                pltpu.VMEM((nh, tq, d), jnp.float32),   # output accumulator
            ],
        ),
        compiler_params=_compiler_params(("parallel", "parallel", "arbitrary")),
    )(q4, k4, v4, mask_b1s)


# ----------------------------------------------------------------------------
# Module wrapper: BertSelfAttention.forward(hidden_states, attention_mask)
# ----------------------------------------------------------------------------
@functools.partial(jax.jit, static_argnames=("num_heads",))
def bert_self_attention(hidden_states, attention_mask, params, *, num_heads):
    B, S, H = hidden_states.shape
    d = H // num_heads
    scale = 1.0 / math.sqrt(d)

    # One-time parameter prep (layout/dtype plumbing, kept out of the kernels):
    #  * pre-transpose PyTorch [out, in] Linear weights to [in, out],
    #  * fold 1/sqrt(d) into the query projection,
    #  * cast activations/weights to bf16 (f32 accumulation inside the kernels).
    wq_t = (params["wq"].T * scale).astype(jnp.bfloat16)
    wk_t = params["wk"].T.astype(jnp.bfloat16)
    wv_t = params["wv"].T.astype(jnp.bfloat16)
    bq = (params["bq"] * scale).reshape(1, H).astype(jnp.float32)
    bk = params["bk"].reshape(1, H).astype(jnp.float32)
    bv = params["bv"].reshape(1, H).astype(jnp.float32)

    x2d = hidden_states.reshape(B * S, H).astype(jnp.bfloat16)

    # q/k/v emitted head-major [B, nh, S, d] in bf16 -> no XLA head transposes.
    q4, k4, v4 = qkv_projection(x2d, wq_t, bq, wk_t, bk, wv_t, bv,
                                batch=B, seq=S, num_heads=num_heads)

    # BERT extended additive mask [B, 1, 1, S] -> [B, 1, S]
    # (broadcast over heads and query rows inside the kernel).
    mask_b1s = attention_mask.reshape(B, 1, S).astype(jnp.float32)

    ctx = multi_head_attention(q4, k4, v4, mask_b1s)        # [B, S, nh, d] f32
    return ctx.reshape(B, S, H)                             # free reshape


# ----------------------------------------------------------------------------
# Pure-JAX reference (matches the PyTorch module, eval-mode dropout)
# ----------------------------------------------------------------------------
def _reference(hidden, attention_mask, params, num_heads):
    B, S, H = hidden.shape
    d = H // num_heads

    def proj(w, b):
        return jnp.einsum("bsh,oh->bso", hidden, w) + b

    def heads(t):
        return t.reshape(B, S, num_heads, d).transpose(0, 2, 1, 3)

    q = heads(proj(params["wq"], params["bq"]))
    k = heads(proj(params["wk"], params["bk"]))
    v = heads(proj(params["wv"], params["bv"]))

    s = jnp.einsum("bhqd,bhkd->bhqk", q, k) / math.sqrt(d)
    s = s + attention_mask                                  # [B,1,1,S] broadcast
    p = jax.nn.softmax(s, axis=-1)
    ctx = jnp.einsum("bhqk,bhkd->bhqd", p, v)
    return ctx.transpose(0, 2, 1, 3).reshape(B, S, H)


if __name__ == "__main__":
    # small config: batch=2, seq=8, hidden=32, heads=4 (head_dim=8)
    B, S, H, NH = 2, 8, 32, 4

    key = jax.random.PRNGKey(0)
    ks = jax.random.split(key, 8)

    params = {
        "wq": 0.05 * jax.random.normal(ks[0], (H, H), jnp.float32),  # [out, in]
        "bq": 0.05 * jax.random.normal(ks[1], (H,), jnp.float32),
        "wk": 0.05 * jax.random.normal(ks[2], (H, H), jnp.float32),
        "bk": 0.05 * jax.random.normal(ks[3], (H,), jnp.float32),
        "wv": 0.05 * jax.random.normal(ks[4], (H, H), jnp.float32),
        "bv": 0.05 * jax.random.normal(ks[5], (H,), jnp.float32),
    }

    hidden = jax.random.normal(ks[6], (B, S, H), jnp.float32)

    # BERT-style extended additive mask: 0 for valid keys, -10000 for padding.
    key_lengths = jnp.array([S, 5])
    mask_2d = jnp.where(jnp.arange(S)[None, :] < key_lengths[:, None],
                        0.0, -10000.0).astype(jnp.float32)
    attention_mask = mask_2d.reshape(B, 1, 1, S)

    ctx = bert_self_attention(hidden, attention_mask, params, num_heads=NH)
    jax.block_until_ready(ctx)

    ref = _reference(hidden, attention_mask, params, NH)
    assert ctx.shape == (B, S, H)
    err = float(jnp.max(jnp.abs(ctx.astype(jnp.float32) - ref)))
    assert err < 2e-2, f"max abs error {err}"

    print("KERNEL_OK")
</pallas_src>

<mosaic_0001>
module attributes {stable_mosaic.version = 11 : i64} {
  func.func @_qkv_proj_kernel(%arg0: i32, %arg1: i32, %arg2: memref<8x32xbf16, #tpu.memory_space<vmem>>, %arg3: memref<32x32xbf16, #tpu.memory_space<vmem>>, %arg4: memref<32x32xbf16, #tpu.memory_space<vmem>>, %arg5: memref<32x32xbf16, #tpu.memory_space<vmem>>, %arg6: memref<1x32xf32, #tpu.memory_space<vmem>>, %arg7: memref<1x32xf32, #tpu.memory_space<vmem>>, %arg8: memref<1x32xf32, #tpu.memory_space<vmem>>, %arg9: memref<1x4x8x8xbf16, #tpu.memory_space<vmem>>, %arg10: memref<1x4x8x8xbf16, #tpu.memory_space<vmem>>, %arg11: memref<1x4x8x8xbf16, #tpu.memory_space<vmem>>) attributes {dimension_semantics = [#tpu.dimension_semantics<parallel>, #tpu.dimension_semantics<parallel>], iteration_bounds = array<i64: 2, 1>, scalar_prefetch = 0 : i64, scratch_operands = 0 : i64, tpu.core_type = #tpu.core_type<tc>, window_params = [{transform_indices = @transform_0, window_bounds = array<i64: 8, 32>}, {pipeline_mode = #tpu.pipeline_mode<synchronous>, transform_indices = @transform_1, window_bounds = array<i64: 32, 32>}, {pipeline_mode = #tpu.pipeline_mode<synchronous>, transform_indices = @transform_2, window_bounds = array<i64: 32, 32>}, {pipeline_mode = #tpu.pipeline_mode<synchronous>, transform_indices = @transform_3, window_bounds = array<i64: 32, 32>}, {pipeline_mode = #tpu.pipeline_mode<synchronous>, transform_indices = @transform_4, window_bounds = array<i64: 1, 32>}, {pipeline_mode = #tpu.pipeline_mode<synchronous>, transform_indices = @transform_5, window_bounds = array<i64: 1, 32>}, {pipeline_mode = #tpu.pipeline_mode<synchronous>, transform_indices = @transform_6, window_bounds = array<i64: 1, 32>}, {transform_indices = @transform_7, window_bounds = array<i64: 1, 4, 8, 8>}, {transform_indices = @transform_8, window_bounds = array<i64: 1, 4, 8, 8>}, {transform_indices = @transform_9, window_bounds = array<i64: 1, 4, 8, 8>}]} {
    %c0 = arith.constant 0 : index
    %c0_0 = arith.constant 0 : index
    %0 = vector.load %arg2[%c0, %c0_0] : memref<8x32xbf16, #tpu.memory_space<vmem>>, vector<8x32xbf16>
    %c0_1 = arith.constant 0 : index
    %c0_2 = arith.constant 0 : index
    %1 = vector.load %arg3[%c0_1, %c0_2] : memref<32x32xbf16, #tpu.memory_space<vmem>>, vector<32x32xbf16>
    %cst = arith.constant dense<0.000000e+00> : vector<8x32xf32>
    %2 = tpu.matmul %0, %1, %cst {dimension_numbers = #tpu.dot_dimension_numbers<[1], [0], [0], [1], [0, 0, 1, 1], [], []>} : vector<8x32xbf16>, vector<32x32xbf16>, vector<8x32xf32> -> vector<8x32xf32>
    %c0_3 = arith.constant 0 : index
    %c0_4 = arith.constant 0 : index
    %3 = vector.load %arg6[%c0_3, %c0_4] : memref<1x32xf32, #tpu.memory_space<vmem>>, vector<1x32xf32>
    %4 = vector.broadcast %3 : vector<1x32xf32> to vector<8x32xf32>
    %5 = arith.addf %2, %4 : vector<8x32xf32>
    %6 = arith.truncf %5 : vector<8x32xf32> to vector<8x32xbf16>
    %7 = vector.extract_strided_slice %6 {offsets = [0, 0], sizes = [8, 8], strides = [1, 1]} : vector<8x32xbf16> to vector<8x8xbf16>
    %c0_5 = arith.constant 0 : index
    %c0_6 = arith.constant 0 : index
    %c0_7 = arith.constant 0 : index
    %c0_8 = arith.constant 0 : index
    %8 = vector.load %arg9[%c0_5, %c0_6, %c0_7, %c0_8] : memref<1x4x8x8xbf16, #tpu.memory_space<vmem>>, vector<1x1x8x8xbf16>
    %9 = vector.shape_cast %8 : vector<1x1x8x8xbf16> to vector<8x8xbf16>
    %10 = vector.shape_cast %7 : vector<8x8xbf16> to vector<1x1x8x8xbf16>
    tpu.vector_store %arg9[%c0_5, %c0_6, %c0_7, %c0_8], %10 {strides = array<i32>} : memref<1x4x8x8xbf16, #tpu.memory_space<vmem>>, vector<1x1x8x8xbf16>,
    %11 = vector.extract_strided_slice %6 {offsets = [0, 8], sizes = [8, 8], strides = [1, 1]} : vector<8x32xbf16> to vector<8x8xbf16>
    %c0_9 = arith.constant 0 : index
    %c1 = arith.constant 1 : index
    %c0_10 = arith.constant 0 : index
    %c0_11 = arith.constant 0 : index
    %12 = vector.load %arg9[%c0_9, %c1, %c0_10, %c0_11] : memref<1x4x8x8xbf16, #tpu.memory_space<vmem>>, vector<1x1x8x8xbf16>
    %13 = vector.shape_cast %12 : vector<1x1x8x8xbf16> to vector<8x8xbf16>
    %14 = vector.shape_cast %11 : vector<8x8xbf16> to vector<1x1x8x8xbf16>
    tpu.vector_store %arg9[%c0_9, %c1, %c0_10, %c0_11], %14 {strides = array<i32>} : memref<1x4x8x8xbf16, #tpu.memory_space<vmem>>, vector<1x1x8x8xbf16>,
    %15 = vector.extract_strided_slice %6 {offsets = [0, 16], sizes = [8, 8], strides = [1, 1]} : vector<8x32xbf16> to vector<8x8xbf16>
    %c0_12 = arith.constant 0 : index
    %c2 = arith.constant 2 : index
    %c0_13 = arith.constant 0 : index
    %c0_14 = arith.constant 0 : index
    %16 = vector.load %arg9[%c0_12, %c2, %c0_13, %c0_14] : memref<1x4x8x8xbf16, #tpu.memory_space<vmem>>, vector<1x1x8x8xbf16>
    %17 = vector.shape_cast %16 : vector<1x1x8x8xbf16> to vector<8x8xbf16>
    %18 = vector.shape_cast %15 : vector<8x8xbf16> to vector<1x1x8x8xbf16>
    tpu.vector_store %arg9[%c0_12, %c2, %c0_13, %c0_14], %18 {strides = array<i32>} : memref<1x4x8x8xbf16, #tpu.memory_space<vmem>>, vector<1x1x8x8xbf16>,
    %19 = vector.extract_strided_slice %6 {offsets = [0, 24], sizes = [8, 8], strides = [1, 1]} : vector<8x32xbf16> to vector<8x8xbf16>
    %c0_15 = arith.constant 0 : index
    %c3 = arith.constant 3 : index
    %c0_16 = arith.constant 0 : index
    %c0_17 = arith.constant 0 : index
    %20 = vector.load %arg9[%c0_15, %c3, %c0_16, %c0_17] : memref<1x4x8x8xbf16, #tpu.memory_space<vmem>>, vector<1x1x8x8xbf16>
    %21 = vector.shape_cast %20 : vector<1x1x8x8xbf16> to vector<8x8xbf16>
    %22 = vector.shape_cast %19 : vector<8x8xbf16> to vector<1x1x8x8xbf16>
    tpu.vector_store %arg9[%c0_15, %c3, %c0_16, %c0_17], %22 {strides = array<i32>} : memref<1x4x8x8xbf16, #tpu.memory_space<vmem>>, vector<1x1x8x8xbf16>,
    %c0_18 = arith.constant 0 : index
    %c0_19 = arith.constant 0 : index
    %23 = vector.load %arg4[%c0_18, %c0_19] : memref<32x32xbf16, #tpu.memory_space<vmem>>, vector<32x32xbf16>
    %cst_20 = arith.constant dense<0.000000e+00> : vector<8x32xf32>
    %24 = tpu.matmul %0, %23, %cst_20 {dimension_numbers = #tpu.dot_dimension_numbers<[1], [0], [0], [1], [0, 0, 1, 1], [], []>} : vector<8x32xbf16>, vector<32x32xbf16>, vector<8x32xf32> -> vector<8x32xf32>
    %c0_21 = arith.constant 0 : index
    %c0_22 = arith.constant 0 : index
    %25 = vector.load %arg7[%c0_21, %c0_22] : memref<1x32xf32, #tpu.memory_space<vmem>>, vector<1x32xf32>
    %26 = vector.broadcast %25 : vector<1x32xf32> to vector<8x32xf32>
    %27 = arith.addf %24, %26 : vector<8x32xf32>
    %28 = arith.truncf %27 : vector<8x32xf32> to vector<8x32xbf16>
    %29 = vector.extract_strided_slice %28 {offsets = [0, 0], sizes = [8, 8], strides = [1, 1]} : vector<8x32xbf16> to vector<8x8xbf16>
    %c0_23 = arith.constant 0 : index
    %c0_24 = arith.constant 0 : index
    %c0_25 = arith.constant 0 : index
    %c0_26 = arith.constant 0 : index
    %30 = vector.load %arg10[%c0_23, %c0_24, %c0_25, %c0_26] : memref<1x4x8x8xbf16, #tpu.memory_space<vmem>>, vector<1x1x8x8xbf16>
    %31 = vector.shape_cast %30 : vector<1x1x8x8xbf16> to vector<8x8xbf16>
    %32 = vector.shape_cast %29 : vector<8x8xbf16> to vector<1x1x8x8xbf16>
    tpu.vector_store %arg10[%c0_23, %c0_24, %c0_25, %c0_26], %32 {strides = array<i32>} : memref<1x4x8x8xbf16, #tpu.memory_space<vmem>>, vector<1x1x8x8xbf16>,
    %33 = vector.extract_strided_slice %28 {offsets = [0, 8], sizes = [8, 8], strides = [1, 1]} : vector<8x32xbf16> to vector<8x8xbf16>
    %c0_27 = arith.constant 0 : index
    %c1_28 = arith.constant 1 : index
    %c0_29 = arith.constant 0 : index
    %c0_30 = arith.constant 0 : index
    %34 = vector.load %arg10[%c0_27, %c1_28, %c0_29, %c0_30] : memref<1x4x8x8xbf16, #tpu.memory_space<vmem>>, vector<1x1x8x8xbf16>
    %35 = vector.shape_cast %34 : vector<1x1x8x8xbf16> to vector<8x8xbf16>
    %36 = vector.shape_cast %33 : vector<8x8xbf16> to vector<1x1x8x8xbf16>
    tpu.vector_store %arg10[%c0_27, %c1_28, %c0_29, %c0_30], %36 {strides = array<i32>} : memref<1x4x8x8xbf16, #tpu.memory_space<vmem>>, vector<1x1x8x8xbf16>,
    %37 = vector.extract_strided_slice %28 {offsets = [0, 16], sizes = [8, 8], strides = [1, 1]} : vector<8x32xbf16> to vector<8x8xbf16>
    %c0_31 = arith.constant 0 : index
    %c2_32 = arith.constant 2 : index
    %c0_33 = arith.constant 0 : index
    %c0_34 = arith.constant 0 : index
    %38 = vector.load %arg10[%c0_31, %c2_32, %c0_33, %c0_34] : memref<1x4x8x8xbf16, #tpu.memory_space<vmem>>, vector<1x1x8x8xbf16>
    %39 = vector.shape_cast %38 : vector<1x1x8x8xbf16> to vector<8x8xbf16>
    %40 = vector.shape_cast %37 : vector<8x8xbf16> to vector<1x1x8x8xbf16>
    tpu.vector_store %arg10[%c0_31, %c2_32, %c0_33, %c0_34], %40 {strides = array<i32>} : memref<1x4x8x8xbf16, #tpu.memory_space<vmem>>, vector<1x1x8x8xbf16>,
    %41 = vector.extract_strided_slice %28 {offsets = [0, 24], sizes = [8, 8], strides = [1, 1]} : vector<8x32xbf16> to vector<8x8xbf16>
    %c0_35 = arith.constant 0 : index
    %c3_36 = arith.constant 3 : index
    %c0_37 = arith.constant 0 : index
    %c0_38 = arith.constant 0 : index
    %42 = vector.load %arg10[%c0_35, %c3_36, %c0_37, %c0_38] : memref<1x4x8x8xbf16, #tpu.memory_space<vmem>>, vector<1x1x8x8xbf16>
    %43 = vector.shape_cast %42 : vector<1x1x8x8xbf16> to vector<8x8xbf16>
    %44 = vector.shape_cast %41 : vector<8x8xbf16> to vector<1x1x8x8xbf16>
    tpu.vector_store %arg10[%c0_35, %c3_36, %c0_37, %c0_38], %44 {strides = array<i32>} : memref<1x4x8x8xbf16, #tpu.memory_space<vmem>>, vector<1x1x8x8xbf16>,
    %c0_39 = arith.constant 0 : index
    %c0_40 = arith.constant 0 : index
    %45 = vector.load %arg5[%c0_39, %c0_40] : memref<32x32xbf16, #tpu.memory_space<vmem>>, vector<32x32xbf16>
    %cst_41 = arith.constant dense<0.000000e+00> : vector<8x32xf32>
    %46 = tpu.matmul %0, %45, %cst_41 {dimension_numbers = #tpu.dot_dimension_numbers<[1], [0], [0], [1], [0, 0, 1, 1], [], []>} : vector<8x32xbf16>, vector<32x32xbf16>, vector<8x32xf32> -> vector<8x32xf32>
    %c0_42 = arith.constant 0 : index
    %c0_43 = arith.constant 0 : index
    %47 = vector.load %arg8[%c0_42, %c0_43] : memref<1x32xf32, #tpu.memory_space<vmem>>, vector<1x32xf32>
    %48 = vector.broadcast %47 : vector<1x32xf32> to vector<8x32xf32>
    %49 = arith.addf %46, %48 : vector<8x32xf32>
    %50 = arith.truncf %49 : vector<8x32xf32> to vector<8x32xbf16>
    %51 = vector.extract_strided_slice %50 {offsets = [0, 0], sizes = [8, 8], strides = [1, 1]} : vector<8x32xbf16> to vector<8x8xbf16>
    %c0_44 = arith.constant 0 : index
    %c0_45 = arith.constant 0 : index
    %c0_46 = arith.constant 0 : index
    %c0_47 = arith.constant 0 : index
    %52 = vector.load %arg11[%c0_44, %c0_45, %c0_46, %c0_47] : memref<1x4x8x8xbf16, #tpu.memory_space<vmem>>, vector<1x1x8x8xbf16>
    %53 = vector.shape_cast %52 : vector<1x1x8x8xbf16> to vector<8x8xbf16>
    %54 = vector.shape_cast %51 : vector<8x8xbf16> to vector<1x1x8x8xbf16>
    tpu.vector_store %arg11[%c0_44, %c0_45, %c0_46, %c0_47], %54 {strides = array<i32>} : memref<1x4x8x8xbf16, #tpu.memory_space<vmem>>, vector<1x1x8x8xbf16>,
    %55 = vector.extract_strided_slice %50 {offsets = [0, 8], sizes = [8, 8], strides = [1, 1]} : vector<8x32xbf16> to vector<8x8xbf16>
    %c0_48 = arith.constant 0 : index
    %c1_49 = arith.constant 1 : index
    %c0_50 = arith.constant 0 : index
    %c0_51 = arith.constant 0 : index
    %56 = vector.load %arg11[%c0_48, %c1_49, %c0_50, %c0_51] : memref<1x4x8x8xbf16, #tpu.memory_space<vmem>>, vector<1x1x8x8xbf16>
    %57 = vector.shape_cast %56 : vector<1x1x8x8xbf16> to vector<8x8xbf16>
    %58 = vector.shape_cast %55 : vector<8x8xbf16> to vector<1x1x8x8xbf16>
    tpu.vector_store %arg11[%c0_48, %c1_49, %c0_50, %c0_51], %58 {strides = array<i32>} : memref<1x4x8x8xbf16, #tpu.memory_space<vmem>>, vector<1x1x8x8xbf16>,
    %59 = vector.extract_strided_slice %50 {offsets = [0, 16], sizes = [8, 8], strides = [1, 1]} : vector<8x32xbf16> to vector<8x8xbf16>
    %c0_52 = arith.constant 0 : index
    %c2_53 = arith.constant 2 : index
    %c0_54 = arith.constant 0 : index
    %c0_55 = arith.constant 0 : index
    %60 = vector.load %arg11[%c0_52, %c2_53, %c0_54, %c0_55] : memref<1x4x8x8xbf16, #tpu.memory_space<vmem>>, vector<1x1x8x8xbf16>
    %61 = vector.shape_cast %60 : vector<1x1x8x8xbf16> to vector<8x8xbf16>
    %62 = vector.shape_cast %59 : vector<8x8xbf16> to vector<1x1x8x8xbf16>
    tpu.vector_store %arg11[%c0_52, %c2_53, %c0_54, %c0_55], %62 {strides = array<i32>} : memref<1x4x8x8xbf16, #tpu.memory_space<vmem>>, vector<1x1x8x8xbf16>,
    %63 = vector.extract_strided_slice %50 {offsets = [0, 24], sizes = [8, 8], strides = [1, 1]} : vector<8x32xbf16> to vector<8x8xbf16>
    %c0_56 = arith.constant 0 : index
    %c3_57 = arith.constant 3 : index
    %c0_58 = arith.constant 0 : index
    %c0_59 = arith.constant 0 : index
    %64 = vector.load %arg11[%c0_56, %c3_57, %c0_58, %c0_59] : memref<1x4x8x8xbf16, #tpu.memory_space<vmem>>, vector<1x1x8x8xbf16>
    %65 = vector.shape_cast %64 : vector<1x1x8x8xbf16> to vector<8x8xbf16>
    %66 = vector.shape_cast %63 : vector<8x8xbf16> to vector<1x1x8x8xbf16>
    tpu.vector_store %arg11[%c0_56, %c3_57, %c0_58, %c0_59], %66 {strides = array<i32>} : memref<1x4x8x8xbf16, #tpu.memory_space<vmem>>, vector<1x1x8x8xbf16>,
    return
  }
  func.func @transform_0(%arg0: i32, %arg1: i32) -> (i32, i32) {
    %c1_i32 = arith.constant 1 : i32
    %0 = arith.muli %arg0, %c1_i32 : i32
    %1 = arith.addi %0, %arg1 : i32
    %c0_i32 = arith.constant 0 : i32
    %c0_i32_0 = arith.constant 0 : i32
    return %1, %c0_i32 : i32, i32
  }
  func.func @transform_1(%arg0: i32, %arg1: i32) -> (i32, i32) {
    %c0_i32 = arith.constant 0 : i32
    %c0_i32_0 = arith.constant 0 : i32
    %c0_i32_1 = arith.constant 0 : i32
    return %c0_i32, %c0_i32_0 : i32, i32
  }
  func.func @transform_2(%arg0: i32, %arg1: i32) -> (i32, i32) {
    %c0_i32 = arith.constant 0 : i32
    %c0_i32_0 = arith.constant 0 : i32
    %c0_i32_1 = arith.constant 0 : i32
    return %c0_i32, %c0_i32_0 : i32, i32
  }
  func.func @transform_3(%arg0: i32, %arg1: i32) -> (i32, i32) {
    %c0_i32 = arith.constant 0 : i32
    %c0_i32_0 = arith.constant 0 : i32
    %c0_i32_1 = arith.constant 0 : i32
    return %c0_i32, %c0_i32_0 : i32, i32
  }
  func.func @transform_4(%arg0: i32, %arg1: i32) -> (i32, i32) {
    %c0_i32 = arith.constant 0 : i32
    %c0_i32_0 = arith.constant 0 : i32
    %c0_i32_1 = arith.constant 0 : i32
    return %c0_i32, %c0_i32_0 : i32, i32
  }
  func.func @transform_5(%arg0: i32, %arg1: i32) -> (i32, i32) {
    %c0_i32 = arith.constant 0 : i32
    %c0_i32_0 = arith.constant 0 : i32
    %c0_i32_1 = arith.constant 0 : i32
    return %c0_i32, %c0_i32_0 : i32, i32
  }
  func.func @transform_6(%arg0: i32, %arg1: i32) -> (i32, i32) {
    %c0_i32 = arith.constant 0 : i32
    %c0_i32_0 = arith.constant 0 : i32
    %c0_i32_1 = arith.constant 0 : i32
    return %c0_i32, %c0_i32_0 : i32, i32
  }
  func.func @transform_7(%arg0: i32, %arg1: i32) -> (i32, i32, i32, i32) {
    %c0_i32 = arith.constant 0 : i32
    %c0_i32_0 = arith.constant 0 : i32
    %c0_i32_1 = arith.constant 0 : i32
    return %arg0, %c0_i32, %arg1, %c0_i32_0 : i32, i32, i32, i32
  }
  func.func @transform_8(%arg0: i32, %arg1: i32) -> (i32, i32, i32, i32) {
    %c0_i32 = arith.constant 0 : i32
    %c0_i32_0 = arith.constant 0 : i32
    %c0_i32_1 = arith.constant 0 : i32
    return %arg0, %c0_i32, %arg1, %c0_i32_0 : i32, i32, i32, i32
  }
  func.func @transform_9(%arg0: i32, %arg1: i32) -> (i32, i32, i32, i32) {
    %c0_i32 = arith.constant 0 : i32
    %c0_i32_0 = arith.constant 0 : i32
    %c0_i32_1 = arith.constant 0 : i32
    return %arg0, %c0_i32, %arg1, %c0_i32_0 : i32, i32, i32, i32
  }
}

module attributes {stable_mosaic.version = 11 : i64} {
  func.func @_attn_kernel(%arg0: i32, %arg1: i32, %arg2: i32, %arg3: memref<1x4x8x8xbf16, #tpu.memory_space<vmem>>, %arg4: memref<1x4x8x8xbf16, #tpu.memory_space<vmem>>, %arg5: memref<1x4x8x8xbf16, #tpu.memory_space<vmem>>, %arg6: memref<1x1x8xf32, #tpu.memory_space<vmem>>, %arg7: memref<1x8x4x8xf32, #tpu.memory_space<vmem>>, %arg8: memref<4x8x1xf32, #tpu.memory_space<vmem>>, %arg9: memref<4x8x1xf32, #tpu.memory_space<vmem>>, %arg10: memref<4x8x8xf32, #tpu.memory_space<vmem>>) attributes {dimension_semantics = [#tpu.dimension_semantics<parallel>, #tpu.dimension_semantics<parallel>, #tpu.dimension_semantics<arbitrary>], iteration_bounds = array<i64: 2, 1, 1>, scalar_prefetch = 0 : i64, scratch_operands = 3 : i64, tpu.core_type = #tpu.core_type<tc>, window_params = [{transform_indices = @transform_0, window_bounds = array<i64: 1, 4, 8, 8>}, {transform_indices = @transform_1, window_bounds = array<i64: 1, 4, 8, 8>}, {transform_indices = @transform_2, window_bounds = array<i64: 1, 4, 8, 8>}, {transform_indices = @transform_3, window_bounds = array<i64: 1, 1, 8>}, {transform_indices = @transform_4, window_bounds = array<i64: 1, 8, 4, 8>}]} {
    %c0_i32 = arith.constant 0 : i32
    %0 = arith.cmpi eq, %arg2, %c0_i32 : i32
    %1 = arith.extui %0 : i1 to i32
    %c0_i32_0 = arith.constant 0 : i32
    %2 = arith.cmpi ne, %1, %c0_i32_0 : i32
    scf.if %2 {
      %cst_137 = arith.constant -1.000000e+30 : f32
      %172 = vector.broadcast %cst_137 : f32 to vector<4x8x1xf32>
      %c0_138 = arith.constant 0 : index
      %c0_139 = arith.constant 0 : index
      %c0_140 = arith.constant 0 : index
      %173 = vector.load %arg8[%c0_138, %c0_139, %c0_140] : memref<4x8x1xf32, #tpu.memory_space<vmem>>, vector<4x8x1xf32>
      tpu.vector_store %arg8[%c0_138, %c0_139, %c0_140], %172 {strides = array<i32>} : memref<4x8x1xf32, #tpu.memory_space<vmem>>, vector<4x8x1xf32>,
      %cst_141 = arith.constant 0.000000e+00 : f32
      %174 = vector.broadcast %cst_141 : f32 to vector<4x8x1xf32>
      %c0_142 = arith.constant 0 : index
      %c0_143 = arith.constant 0 : index
      %c0_144 = arith.constant 0 : index
      %175 = vector.load %arg9[%c0_142, %c0_143, %c0_144] : memref<4x8x1xf32, #tpu.memory_space<vmem>>, vector<4x8x1xf32>
      tpu.vector_store %arg9[%c0_142, %c0_143, %c0_144], %174 {strides = array<i32>} : memref<4x8x1xf32, #tpu.memory_space<vmem>>, vector<4x8x1xf32>,
      %cst_145 = arith.constant 0.000000e+00 : f32
      %176 = vector.broadcast %cst_145 : f32 to vector<4x8x8xf32>
      %c0_146 = arith.constant 0 : index
      %c0_147 = arith.constant 0 : index
      %c0_148 = arith.constant 0 : index
      %177 = vector.load %arg10[%c0_146, %c0_147, %c0_148] : memref<4x8x8xf32, #tpu.memory_space<vmem>>, vector<4x8x8xf32>
      tpu.vector_store %arg10[%c0_146, %c0_147, %c0_148], %176 {strides = array<i32>} : memref<4x8x8xf32, #tpu.memory_space<vmem>>, vector<4x8x8xf32>,
    } else {
    }
    %c0 = arith.constant 0 : index
    %c0_1 = arith.constant 0 : index
    %c0_2 = arith.constant 0 : index
    %3 = vector.load %arg6[%c0, %c0_1, %c0_2] : memref<1x1x8xf32, #tpu.memory_space<vmem>>, vector<1x1x8xf32>
    %4 = vector.shape_cast %3 : vector<1x1x8xf32> to vector<1x8xf32>
    %c0_3 = arith.constant 0 : index
    %c0_4 = arith.constant 0 : index
    %c0_5 = arith.constant 0 : index
    %c0_6 = arith.constant 0 : index
    %5 = vector.load %arg3[%c0_3, %c0_4, %c0_5, %c0_6] : memref<1x4x8x8xbf16, #tpu.memory_space<vmem>>, vector<1x1x8x8xbf16>
    %6 = vector.shape_cast %5 : vector<1x1x8x8xbf16> to vector<8x8xbf16>
    %c0_7 = arith.constant 0 : index
    %c0_8 = arith.constant 0 : index
    %c0_9 = arith.constant 0 : index
    %c0_10 = arith.constant 0 : index
    %7 = vector.load %arg4[%c0_7, %c0_8, %c0_9, %c0_10] : memref<1x4x8x8xbf16, #tpu.memory_space<vmem>>, vector<1x1x8x8xbf16>
    %8 = vector.shape_cast %7 : vector<1x1x8x8xbf16> to vector<8x8xbf16>
    %c0_11 = arith.constant 0 : index
    %c0_12 = arith.constant 0 : index
    %c0_13 = arith.constant 0 : index
    %c0_14 = arith.constant 0 : index
    %9 = vector.load %arg5[%c0_11, %c0_12, %c0_13, %c0_14] : memref<1x4x8x8xbf16, #tpu.memory_space<vmem>>, vector<1x1x8x8xbf16>
    %10 = vector.shape_cast %9 : vector<1x1x8x8xbf16> to vector<8x8xbf16>
    %cst = arith.constant dense<0.000000e+00> : vector<8x8xf32>
    %11 = tpu.matmul %6, %8, %cst {dimension_numbers = #tpu.dot_dimension_numbers<[1], [1], [0], [0], [0, 0, 1, 0], [], []>} : vector<8x8xbf16>, vector<8x8xbf16>, vector<8x8xf32> -> vector<8x8xf32>
    %12 = vector.broadcast %4 : vector<1x8xf32> to vector<8x8xf32>
    %13 = arith.addf %11, %12 : vector<8x8xf32>
    %c0_15 = arith.constant 0 : index
    %c0_16 = arith.constant 0 : index
    %c0_17 = arith.constant 0 : index
    %14 = vector.load %arg8[%c0_15, %c0_16, %c0_17] : memref<4x8x1xf32, #tpu.memory_space<vmem>>, vector<1x8x1xf32>
    %15 = vector.shape_cast %14 : vector<1x8x1xf32> to vector<8x1xf32>
    %cst_18 = arith.constant dense<0xFF800000> : vector<8xf32>
    %16 = vector.multi_reduction <maximumf>, %13, %cst_18 [1] : vector<8x8xf32> to vector<8xf32>
    %17 = vector.shape_cast %16 : vector<8xf32> to vector<8x1xf32>
    %18 = arith.maximumf %15, %17 : vector<8x1xf32>
    %19 = arith.subf %15, %18 : vector<8x1xf32>
    %20 = math.exp %19 : vector<8x1xf32>
    %21 = vector.broadcast %18 : vector<8x1xf32> to vector<8x8xf32>
    %22 = arith.subf %13, %21 : vector<8x8xf32>
    %23 = math.exp %22 : vector<8x8xf32>
    %c0_19 = arith.constant 0 : index
    %c0_20 = arith.constant 0 : index
    %c0_21 = arith.constant 0 : index
    %24 = vector.load %arg9[%c0_19, %c0_20, %c0_21] : memref<4x8x1xf32, #tpu.memory_space<vmem>>, vector<1x8x1xf32>
    %25 = vector.shape_cast %24 : vector<1x8x1xf32> to vector<8x1xf32>
    %26 = arith.mulf %20, %25 : vector<8x1xf32>
    %cst_22 = arith.constant dense<0.000000e+00> : vector<8xf32>
    %27 = vector.multi_reduction <add>, %23, %cst_22 [1] : vector<8x8xf32> to vector<8xf32>
    %28 = vector.shape_cast %27 : vector<8xf32> to vector<8x1xf32>
    %29 = arith.addf %26, %28 : vector<8x1xf32>
    %c0_23 = arith.constant 0 : index
    %c0_24 = arith.constant 0 : index
    %c0_25 = arith.constant 0 : index
    %30 = vector.load %arg9[%c0_23, %c0_24, %c0_25] : memref<4x8x1xf32, #tpu.memory_space<vmem>>, vector<1x8x1xf32>
    %31 = vector.shape_cast %30 : vector<1x8x1xf32> to vector<8x1xf32>
    %32 = vector.shape_cast %29 : vector<8x1xf32> to vector<1x8x1xf32>
    tpu.vector_store %arg9[%c0_23, %c0_24, %c0_25], %32 {strides = array<i32>} : memref<4x8x1xf32, #tpu.memory_space<vmem>>, vector<1x8x1xf32>,
    %c0_26 = arith.constant 0 : index
    %c0_27 = arith.constant 0 : index
    %c0_28 = arith.constant 0 : index
    %33 = vector.load %arg10[%c0_26, %c0_27, %c0_28] : memref<4x8x8xf32, #tpu.memory_space<vmem>>, vector<1x8x8xf32>
    %34 = vector.shape_cast %33 : vector<1x8x8xf32> to vector<8x8xf32>
    %35 = vector.broadcast %20 : vector<8x1xf32> to vector<8x8xf32>
    %36 = arith.mulf %35, %34 : vector<8x8xf32>
    %37 = arith.truncf %23 : vector<8x8xf32> to vector<8x8xbf16>
    %cst_29 = arith.constant dense<0.000000e+00> : vector<8x8xf32>
    %38 = tpu.matmul %37, %10, %cst_29 {dimension_numbers = #tpu.dot_dimension_numbers<[1], [0], [0], [1], [0, 0, 1, 1], [], []>} : vector<8x8xbf16>, vector<8x8xbf16>, vector<8x8xf32> -> vector<8x8xf32>
    %39 = arith.addf %36, %38 : vector<8x8xf32>
    %c0_30 = arith.constant 0 : index
    %c0_31 = arith.constant 0 : index
    %c0_32 = arith.constant 0 : index
    %40 = vector.load %arg10[%c0_30, %c0_31, %c0_32] : memref<4x8x8xf32, #tpu.memory_space<vmem>>, vector<1x8x8xf32>
    %41 = vector.shape_cast %40 : vector<1x8x8xf32> to vector<8x8xf32>
    %42 = vector.shape_cast %39 : vector<8x8xf32> to vector<1x8x8xf32>
    tpu.vector_store %arg10[%c0_30, %c0_31, %c0_32], %42 {strides = array<i32>} : memref<4x8x8xf32, #tpu.memory_space<vmem>>, vector<1x8x8xf32>,
    %c0_33 = arith.constant 0 : index
    %c0_34 = arith.constant 0 : index
    %c0_35 = arith.constant 0 : index
    %43 = vector.load %arg8[%c0_33, %c0_34, %c0_35] : memref<4x8x1xf32, #tpu.memory_space<vmem>>, vector<1x8x1xf32>
    %44 = vector.shape_cast %43 : vector<1x8x1xf32> to vector<8x1xf32>
    %45 = vector.shape_cast %18 : vector<8x1xf32> to vector<1x8x1xf32>
    tpu.vector_store %arg8[%c0_33, %c0_34, %c0_35], %45 {strides = array<i32>} : memref<4x8x1xf32, #tpu.memory_space<vmem>>, vector<1x8x1xf32>,
    %c0_36 = arith.constant 0 : index
    %c1 = arith.constant 1 : index
    %c0_37 = arith.constant 0 : index
    %c0_38 = arith.constant 0 : index
    %46 = vector.load %arg3[%c0_36, %c1, %c0_37, %c0_38] : memref<1x4x8x8xbf16, #tpu.memory_space<vmem>>, vector<1x1x8x8xbf16>
    %47 = vector.shape_cast %46 : vector<1x1x8x8xbf16> to vector<8x8xbf16>
    %c0_39 = arith.constant 0 : index
    %c1_40 = arith.constant 1 : index
    %c0_41 = arith.constant 0 : index
    %c0_42 = arith.constant 0 : index
    %48 = vector.load %arg4[%c0_39, %c1_40, %c0_41, %c0_42] : memref<1x4x8x8xbf16, #tpu.memory_space<vmem>>, vector<1x1x8x8xbf16>
    %49 = vector.shape_cast %48 : vector<1x1x8x8xbf16> to vector<8x8xbf16>
    %c0_43 = arith.constant 0 : index
    %c1_44 = arith.constant 1 : index
    %c0_45 = arith.constant 0 : index
    %c0_46 = arith.constant 0 : index
    %50 = vector.load %arg5[%c0_43, %c1_44, %c0_45, %c0_46] : memref<1x4x8x8xbf16, #tpu.memory_space<vmem>>, vector<1x1x8x8xbf16>
    %51 = vector.shape_cast %50 : vector<1x1x8x8xbf16> to vector<8x8xbf16>
    %cst_47 = arith.constant dense<0.000000e+00> : vector<8x8xf32>
    %52 = tpu.matmul %47, %49, %cst_47 {dimension_numbers = #tpu.dot_dimension_numbers<[1], [1], [0], [0], [0, 0, 1, 0], [], []>} : vector<8x8xbf16>, vector<8x8xbf16>, vector<8x8xf32> -> vector<8x8xf32>
    %53 = vector.broadcast %4 : vector<1x8xf32> to vector<8x8xf32>
    %54 = arith.addf %52, %53 : vector<8x8xf32>
    %c1_48 = arith.constant 1 : index
    %c0_49 = arith.constant 0 : index
    %c0_50 = arith.constant 0 : index
    %55 = vector.load %arg8[%c1_48, %c0_49, %c0_50] : memref<4x8x1xf32, #tpu.memory_space<vmem>>, vector<1x8x1xf32>
    %56 = vector.shape_cast %55 : vector<1x8x1xf32> to vector<8x1xf32>
    %cst_51 = arith.constant dense<0xFF800000> : vector<8xf32>
    %57 = vector.multi_reduction <maximumf>, %54, %cst_51 [1] : vector<8x8xf32> to vector<8xf32>
    %58 = vector.shape_cast %57 : vector<8xf32> to vector<8x1xf32>
    %59 = arith.maximumf %56, %58 : vector<8x1xf32>
    %60 = arith.subf %56, %59 : vector<8x1xf32>
    %61 = math.exp %60 : vector<8x1xf32>
    %62 = vector.broadcast %59 : vector<8x1xf32> to vector<8x8xf32>
    %63 = arith.subf %54, %62 : vector<8x8xf32>
    %64 = math.exp %63 : vector<8x8xf32>
    %c1_52 = arith.constant 1 : index
    %c0_53 = arith.constant 0 : index
    %c0_54 = arith.constant 0 : index
    %65 = vector.load %arg9[%c1_52, %c0_53, %c0_54] : memref<4x8x1xf32, #tpu.memory_space<vmem>>, vector<1x8x1xf32>
    %66 = vector.shape_cast %65 : vector<1x8x1xf32> to vector<8x1xf32>
    %67 = arith.mulf %61, %66 : vector<8x1xf32>
    %cst_55 = arith.constant dense<0.000000e+00> : vector<8xf32>
    %68 = vector.multi_reduction <add>, %64, %cst_55 [1] : vector<8x8xf32> to vector<8xf32>
    %69 = vector.shape_cast %68 : vector<8xf32> to vector<8x1xf32>
    %70 = arith.addf %67, %69 : vector<8x1xf32>
    %c1_56 = arith.constant 1 : index
    %c0_57 = arith.constant 0 : index
    %c0_58 = arith.constant 0 : index
    %71 = vector.load %arg9[%c1_56, %c0_57, %c0_58] : memref<4x8x1xf32, #tpu.memory_space<vmem>>, vector<1x8x1xf32>
    %72 = vector.shape_cast %71 : vector<1x8x1xf32> to vector<8x1xf32>
    %73 = vector.shape_cast %70 : vector<8x1xf32> to vector<1x8x1xf32>
    tpu.vector_store %arg9[%c1_56, %c0_57, %c0_58], %73 {strides = array<i32>} : memref<4x8x1xf32, #tpu.memory_space<vmem>>, vector<1x8x1xf32>,
    %c1_59 = arith.constant 1 : index
    %c0_60 = arith.constant 0 : index
    %c0_61 = arith.constant 0 : index
    %74 = vector.load %arg10[%c1_59, %c0_60, %c0_61] : memref<4x8x8xf32, #tpu.memory_space<vmem>>, vector<1x8x8xf32>
    %75 = vector.shape_cast %74 : vector<1x8x8xf32> to vector<8x8xf32>
    %76 = vector.broadcast %61 : vector<8x1xf32> to vector<8x8xf32>
    %77 = arith.mulf %76, %75 : vector<8x8xf32>
    %78 = arith.truncf %64 : vector<8x8xf32> to vector<8x8xbf16>
    %cst_62 = arith.constant dense<0.000000e+00> : vector<8x8xf32>
    %79 = tpu.matmul %78, %51, %cst_62 {dimension_numbers = #tpu.dot_dimension_numbers<[1], [0], [0], [1], [0, 0, 1, 1], [], []>} : vector<8x8xbf16>, vector<8x8xbf16>, vector<8x8xf32> -> vector<8x8xf32>
    %80 = arith.addf %77, %79 : vector<8x8xf32>
    %c1_63 = arith.constant 1 : index
    %c0_64 = arith.constant 0 : index
    %c0_65 = arith.constant 0 : index
    %81 = vector.load %arg10[%c1_63, %c0_64, %c0_65] : memref<4x8x8xf32, #tpu.memory_space<vmem>>, vector<1x8x8xf32>
    %82 = vector.shape_cast %81 : vector<1x8x8xf32> to vector<8x8xf32>
    %83 = vector.shape_cast %80 : vector<8x8xf32> to vector<1x8x8xf32>
    tpu.vector_store %arg10[%c1_63, %c0_64, %c0_65], %83 {strides = array<i32>} : memref<4x8x8xf32, #tpu.memory_space<vmem>>, vector<1x8x8xf32>,
    %c1_66 = arith.constant 1 : index
    %c0_67 = arith.constant 0 : index
    %c0_68 = arith.constant 0 : index
    %84 = vector.load %arg8[%c1_66, %c0_67, %c0_68] : memref<4x8x1xf32, #tpu.memory_space<vmem>>, vector<1x8x1xf32>
    %85 = vector.shape_cast %84 : vector<1x8x1xf32> to vector<8x1xf32>
    %86 = vector.shape_cast %59 : vector<8x1xf32> to vector<1x8x1xf32>
    tpu.vector_store %arg8[%c1_66, %c0_67, %c0_68], %86 {strides = array<i32>} : memref<4x8x1xf32, #tpu.memory_space<vmem>>, vector<1x8x1xf32>,
    %c0_69 = arith.constant 0 : index
    %c2 = arith.constant 2 : index
    %c0_70 = arith.constant 0 : index
    %c0_71 = arith.constant 0 : index
    %87 = vector.load %arg3[%c0_69, %c2, %c0_70, %c0_71] : memref<1x4x8x8xbf16, #tpu.memory_space<vmem>>, vector<1x1x8x8xbf16>
    %88 = vector.shape_cast %87 : vector<1x1x8x8xbf16> to vector<8x8xbf16>
    %c0_72 = arith.constant 0 : index
    %c2_73 = arith.constant 2 : index
    %c0_74 = arith.constant 0 : index
    %c0_75 = arith.constant 0 : index
    %89 = vector.load %arg4[%c0_72, %c2_73, %c0_74, %c0_75] : memref<1x4x8x8xbf16, #tpu.memory_space<vmem>>, vector<1x1x8x8xbf16>
    %90 = vector.shape_cast %89 : vector<1x1x8x8xbf16> to vector<8x8xbf16>
    %c0_76 = arith.constant 0 : index
    %c2_77 = arith.constant 2 : index
    %c0_78 = arith.constant 0 : index
    %c0_79 = arith.constant 0 : index
    %91 = vector.load %arg5[%c0_76, %c2_77, %c0_78, %c0_79] : memref<1x4x8x8xbf16, #tpu.memory_space<vmem>>, vector<1x1x8x8xbf16>
    %92 = vector.shape_cast %91 : vector<1x1x8x8xbf16> to vector<8x8xbf16>
    %cst_80 = arith.constant dense<0.000000e+00> : vector<8x8xf32>
    %93 = tpu.matmul %88, %90, %cst_80 {dimension_numbers = #tpu.dot_dimension_numbers<[1], [1], [0], [0], [0, 0, 1, 0], [], []>} : vector<8x8xbf16>, vector<8x8xbf16>, vector<8x8xf32> -> vector<8x8xf32>
    %94 = vector.broadcast %4 : vector<1x8xf32> to vector<8x8xf32>
    %95 = arith.addf %93, %94 : vector<8x8xf32>
    %c2_81 = arith.constant 2 : index
    %c0_82 = arith.constant 0 : index
    %c0_83 = arith.constant 0 : index
    %96 = vector.load %arg8[%c2_81, %c0_82, %c0_83] : memref<4x8x1xf32, #tpu.memory_space<vmem>>, vector<1x8x1xf32>
    %97 = vector.shape_cast %96 : vector<1x8x1xf32> to vector<8x1xf32>
    %cst_84 = arith.constant dense<0xFF800000> : vector<8xf32>
    %98 = vector.multi_reduction <maximumf>, %95, %cst_84 [1] : vector<8x8xf32> to vector<8xf32>
    %99 = vector.shape_cast %98 : vector<8xf32> to vector<8x1xf32>
    %100 = arith.maximumf %97, %99 : vector<8x1xf32>
    %101 = arith.subf %97, %100 : vector<8x1xf32>
    %102 = math.exp %101 : vector<8x1xf32>
    %103 = vector.broadcast %100 : vector<8x1xf32> to vector<8x8xf32>
    %104 = arith.subf %95, %103 : vector<8x8xf32>
    %105 = math.exp %104 : vector<8x8xf32>
    %c2_85 = arith.constant 2 : index
    %c0_86 = arith.constant 0 : index
    %c0_87 = arith.constant 0 : index
    %106 = vector.load %arg9[%c2_85, %c0_86, %c0_87] : memref<4x8x1xf32, #tpu.memory_space<vmem>>, vector<1x8x1xf32>
    %107 = vector.shape_cast %106 : vector<1x8x1xf32> to vector<8x1xf32>
    %108 = arith.mulf %102, %107 : vector<8x1xf32>
    %cst_88 = arith.constant dense<0.000000e+00> : vector<8xf32>
    %109 = vector.multi_reduction <add>, %105, %cst_88 [1] : vector<8x8xf32> to vector<8xf32>
    %110 = vector.shape_cast %109 : vector<8xf32> to vector<8x1xf32>
    %111 = arith.addf %108, %110 : vector<8x1xf32>
    %c2_89 = arith.constant 2 : index
    %c0_90 = arith.constant 0 : index
    %c0_91 = arith.constant 0 : index
    %112 = vector.load %arg9[%c2_89, %c0_90, %c0_91] : memref<4x8x1xf32, #tpu.memory_space<vmem>>, vector<1x8x1xf32>
    %113 = vector.shape_cast %112 : vector<1x8x1xf32> to vector<8x1xf32>
    %114 = vector.shape_cast %111 : vector<8x1xf32> to vector<1x8x1xf32>
    tpu.vector_store %arg9[%c2_89, %c0_90, %c0_91], %114 {strides = array<i32>} : memref<4x8x1xf32, #tpu.memory_space<vmem>>, vector<1x8x1xf32>,
    %c2_92 = arith.constant 2 : index
    %c0_93 = arith.constant 0 : index
    %c0_94 = arith.constant 0 : index
    %115 = vector.load %arg10[%c2_92, %c0_93, %c0_94] : memref<4x8x8xf32, #tpu.memory_space<vmem>>, vector<1x8x8xf32>
    %116 = vector.shape_cast %115 : vector<1x8x8xf32> to vector<8x8xf32>
    %117 = vector.broadcast %102 : vector<8x1xf32> to vector<8x8xf32>
    %118 = arith.mulf %117, %116 : vector<8x8xf32>
    %119 = arith.truncf %105 : vector<8x8xf32> to vector<8x8xbf16>
    %cst_95 = arith.constant dense<0.000000e+00> : vector<8x8xf32>
    %120 = tpu.matmul %119, %92, %cst_95 {dimension_numbers = #tpu.dot_dimension_numbers<[1], [0], [0], [1], [0, 0, 1, 1], [], []>} : vector<8x8xbf16>, vector<8x8xbf16>, vector<8x8xf32> -> vector<8x8xf32>
    %121 = arith.addf %118, %120 : vector<8x8xf32>
    %c2_96 = arith.constant 2 : index
    %c0_97 = arith.constant 0 : index
    %c0_98 = arith.constant 0 : index
    %122 = vector.load %arg10[%c2_96, %c0_97, %c0_98] : memref<4x8x8xf32, #tpu.memory_space<vmem>>, vector<1x8x8xf32>
    %123 = vector.shape_cast %122 : vector<1x8x8xf32> to vector<8x8xf32>
    %124 = vector.shape_cast %121 : vector<8x8xf32> to vector<1x8x8xf32>
    tpu.vector_store %arg10[%c2_96, %c0_97, %c0_98], %124 {strides = array<i32>} : memref<4x8x8xf32, #tpu.memory_space<vmem>>, vector<1x8x8xf32>,
    %c2_99 = arith.constant 2 : index
    %c0_100 = arith.constant 0 : index
    %c0_101 = arith.constant 0 : index
    %125 = vector.load %arg8[%c2_99, %c0_100, %c0_101] : memref<4x8x1xf32, #tpu.memory_space<vmem>>, vector<1x8x1xf32>
    %126 = vector.shape_cast %125 : vector<1x8x1xf32> to vector<8x1xf32>
    %127 = vector.shape_cast %100 : vector<8x1xf32> to vector<1x8x1xf32>
    tpu.vector_store %arg8[%c2_99, %c0_100, %c0_101], %127 {strides = array<i32>} : memref<4x8x1xf32, #tpu.memory_space<vmem>>, vector<1x8x1xf32>,
    %c0_102 = arith.constant 0 : index
    %c3 = arith.constant 3 : index
    %c0_103 = arith.constant 0 : index
    %c0_104 = arith.constant 0 : index
    %128 = vector.load %arg3[%c0_102, %c3, %c0_103, %c0_104] : memref<1x4x8x8xbf16, #tpu.memory_space<vmem>>, vector<1x1x8x8xbf16>
    %129 = vector.shape_cast %128 : vector<1x1x8x8xbf16> to vector<8x8xbf16>
    %c0_105 = arith.constant 0 : index
    %c3_106 = arith.constant 3 : index
    %c0_107 = arith.constant 0 : index
    %c0_108 = arith.constant 0 : index
    %130 = vector.load %arg4[%c0_105, %c3_106, %c0_107, %c0_108] : memref<1x4x8x8xbf16, #tpu.memory_space<vmem>>, vector<1x1x8x8xbf16>
    %131 = vector.shape_cast %130 : vector<1x1x8x8xbf16> to vector<8x8xbf16>
    %c0_109 = arith.constant 0 : index
    %c3_110 = arith.constant 3 : index
    %c0_111 = arith.constant 0 : index
    %c0_112 = arith.constant 0 : index
    %132 = vector.load %arg5[%c0_109, %c3_110, %c0_111, %c0_112] : memref<1x4x8x8xbf16, #tpu.memory_space<vmem>>, vector<1x1x8x8xbf16>
    %133 = vector.shape_cast %132 : vector<1x1x8x8xbf16> to vector<8x8xbf16>
    %cst_113 = arith.constant dense<0.000000e+00> : vector<8x8xf32>
    %134 = tpu.matmul %129, %131, %cst_113 {dimension_numbers = #tpu.dot_dimension_numbers<[1], [1], [0], [0], [0, 0, 1, 0], [], []>} : vector<8x8xbf16>, vector<8x8xbf16>, vector<8x8xf32> -> vector<8x8xf32>
    %135 = vector.broadcast %4 : vector<1x8xf32> to vector<8x8xf32>
    %136 = arith.addf %134, %135 : vector<8x8xf32>
    %c3_114 = arith.constant 3 : index
    %c0_115 = arith.constant 0 : index
    %c0_116 = arith.constant 0 : index
    %137 = vector.load %arg8[%c3_114, %c0_115, %c0_116] : memref<4x8x1xf32, #tpu.memory_space<vmem>>, vector<1x8x1xf32>
    %138 = vector.shape_cast %137 : vector<1x8x1xf32> to vector<8x1xf32>
    %cst_117 = arith.constant dense<0xFF800000> : vector<8xf32>
    %139 = vector.multi_reduction <maximumf>, %136, %cst_117 [1] : vector<8x8xf32> to vector<8xf32>
    %140 = vector.shape_cast %139 : vector<8xf32> to vector<8x1xf32>
    %141 = arith.maximumf %138, %140 : vector<8x1xf32>
    %142 = arith.subf %138, %141 : vector<8x1xf32>
    %143 = math.exp %142 : vector<8x1xf32>
    %144 = vector.broadcast %141 : vector<8x1xf32> to vector<8x8xf32>
    %145 = arith.subf %136, %144 : vector<8x8xf32>
    %146 = math.exp %145 : vector<8x8xf32>
    %c3_118 = arith.constant 3 : index
    %c0_119 = arith.constant 0 : index
    %c0_120 = arith.constant 0 : index
    %147 = vector.load %arg9[%c3_118, %c0_119, %c0_120] : memref<4x8x1xf32, #tpu.memory_space<vmem>>, vector<1x8x1xf32>
    %148 = vector.shape_cast %147 : vector<1x8x1xf32> to vector<8x1xf32>
    %149 = arith.mulf %143, %148 : vector<8x1xf32>
    %cst_121 = arith.constant dense<0.000000e+00> : vector<8xf32>
    %150 = vector.multi_reduction <add>, %146, %cst_121 [1] : vector<8x8xf32> to vector<8xf32>
    %151 = vector.shape_cast %150 : vector<8xf32> to vector<8x1xf32>
    %152 = arith.addf %149, %151 : vector<8x1xf32>
    %c3_122 = arith.constant 3 : index
    %c0_123 = arith.constant 0 : index
    %c0_124 = arith.constant 0 : index
    %153 = vector.load %arg9[%c3_122, %c0_123, %c0_124] : memref<4x8x1xf32, #tpu.memory_space<vmem>>, vector<1x8x1xf32>
    %154 = vector.shape_cast %153 : vector<1x8x1xf32> to vector<8x1xf32>
    %155 = vector.shape_cast %152 : vector<8x1xf32> to vector<1x8x1xf32>
    tpu.vector_store %arg9[%c3_122, %c0_123, %c0_124], %155 {strides = array<i32>} : memref<4x8x1xf32, #tpu.memory_space<vmem>>, vector<1x8x1xf32>,
    %c3_125 = arith.constant 3 : index
    %c0_126 = arith.constant 0 : index
    %c0_127 = arith.constant 0 : index
    %156 = vector.load %arg10[%c3_125, %c0_126, %c0_127] : memref<4x8x8xf32, #tpu.memory_space<vmem>>, vector<1x8x8xf32>
    %157 = vector.shape_cast %156 : vector<1x8x8xf32> to vector<8x8xf32>
    %158 = vector.broadcast %143 : vector<8x1xf32> to vector<8x8xf32>
    %159 = arith.mulf %158, %157 : vector<8x8xf32>
    %160 = arith.truncf %146 : vector<8x8xf32> to vector<8x8xbf16>
    %cst_128 = arith.constant dense<0.000000e+00> : vector<8x8xf32>
    %161 = tpu.matmul %160, %133, %cst_128 {dimension_numbers = #tpu.dot_dimension_numbers<[1], [0], [0], [1], [0, 0, 1, 1], [], []>} : vector<8x8xbf16>, vector<8x8xbf16>, vector<8x8xf32> -> vector<8x8xf32>
    %162 = arith.addf %159, %161 : vector<8x8xf32>
    %c3_129 = arith.constant 3 : index
    %c0_130 = arith.constant 0 : index
    %c0_131 = arith.constant 0 : index
    %163 = vector.load %arg10[%c3_129, %c0_130, %c0_131] : memref<4x8x8xf32, #tpu.memory_space<vmem>>, vector<1x8x8xf32>
    %164 = vector.shape_cast %163 : vector<1x8x8xf32> to vector<8x8xf32>
    %165 = vector.shape_cast %162 : vector<8x8xf32> to vector<1x8x8xf32>
    tpu.vector_store %arg10[%c3_129, %c0_130, %c0_131], %165 {strides = array<i32>} : memref<4x8x8xf32, #tpu.memory_space<vmem>>, vector<1x8x8xf32>,
    %c3_132 = arith.constant 3 : index
    %c0_133 = arith.constant 0 : index
    %c0_134 = arith.constant 0 : index
    %166 = vector.load %arg8[%c3_132, %c0_133, %c0_134] : memref<4x8x1xf32, #tpu.memory_space<vmem>>, vector<1x8x1xf32>
    %167 = vector.shape_cast %166 : vector<1x8x1xf32> to vector<8x1xf32>
    %168 = vector.shape_cast %141 : vector<8x1xf32> to vector<1x8x1xf32>
    tpu.vector_store %arg8[%c3_132, %c0_133, %c0_134], %168 {strides = array<i32>} : memref<4x8x1xf32, #tpu.memory_space<vmem>>, vector<1x8x1xf32>,
    %c0_i32_135 = arith.constant 0 : i32
    %169 = arith.cmpi eq, %arg2, %c0_i32_135 : i32
    %170 = arith.extui %169 : i1 to i32
    %c0_i32_136 = arith.constant 0 : i32
    %171 = arith.cmpi ne, %170, %c0_i32_136 : i32
    scf.if %171 {
      %c0_137 = arith.constant 0 : index
      %c0_138 = arith.constant 0 : index
      %c0_139 = arith.constant 0 : index
      %172 = vector.load %arg9[%c0_137, %c0_138, %c0_139] : memref<4x8x1xf32, #tpu.memory_space<vmem>>, vector<1x8x1xf32>
      %173 = vector.shape_cast %172 : vector<1x8x1xf32> to vector<8x1xf32>
      %174 = tpu.reciprocal %173 {approx = true} : vector<8x1xf32> -> vector<8x1xf32>
      %c0_140 = arith.constant 0 : index
      %c0_141 = arith.constant 0 : index
      %c0_142 = arith.constant 0 : index
      %175 = vector.load %arg10[%c0_140, %c0_141, %c0_142] : memref<4x8x8xf32, #tpu.memory_space<vmem>>, vector<1x8x8xf32>
      %176 = vector.shape_cast %175 : vector<1x8x8xf32> to vector<8x8xf32>
      %177 = vector.broadcast %174 : vector<8x1xf32> to vector<8x8xf32>
      %178 = arith.mulf %176, %177 : vector<8x8xf32>
      %c0_143 = arith.constant 0 : index
      %c0_144 = arith.constant 0 : index
      %c0_145 = arith.constant 0 : index
      %c0_146 = arith.constant 0 : index
      %179 = vector.load %arg7[%c0_143, %c0_144, %c0_145, %c0_146] : memref<1x8x4x8xf32, #tpu.memory_space<vmem>>, vector<1x8x1x8xf32>
      %180 = vector.shape_cast %179 : vector<1x8x1x8xf32> to vector<8x8xf32>
      %181 = vector.shape_cast %178 : vector<8x8xf32> to vector<1x8x1x8xf32>
      tpu.vector_store %arg7[%c0_143, %c0_144, %c0_145, %c0_146], %181 {strides = array<i32>} : memref<1x8x4x8xf32, #tpu.memory_space<vmem>>, vector<1x8x1x8xf32>,
      %c1_147 = arith.constant 1 : index
      %c0_148 = arith.constant 0 : index
      %c0_149 = arith.constant 0 : index
      %182 = vector.load %arg9[%c1_147, %c0_148, %c0_149] : memref<4x8x1xf32, #tpu.memory_space<vmem>>, vector<1x8x1xf32>
      %183 = vector.shape_cast %182 : vector<1x8x1xf32> to vector<8x1xf32>
      %184 = tpu.reciprocal %183 {approx = true} : vector<8x1xf32> -> vector<8x1xf32>
      %c1_150 = arith.constant 1 : index
      %c0_151 = arith.constant 0 : index
      %c0_152 = arith.constant 0 : index
      %185 = vector.load %arg10[%c1_150, %c0_151, %c0_152] : memref<4x8x8xf32, #tpu.memory_space<vmem>>, vector<1x8x8xf32>
      %186 = vector.shape_cast %185 : vector<1x8x8xf32> to vector<8x8xf32>
      %187 = vector.broadcast %184 : vector<8x1xf32> to vector<8x8xf32>
      %188 = arith.mulf %186, %187 : vector<8x8xf32>
      %c0_153 = arith.constant 0 : index
      %c0_154 = arith.constant 0 : index
      %c1_155 = arith.constant 1 : index
      %c0_156 = arith.constant 0 : index
      %189 = vector.load %arg7[%c0_153, %c0_154, %c1_155, %c0_156] : memref<1x8x4x8xf32, #tpu.memory_space<vmem>>, vector<1x8x1x8xf32>
      %190 = vector.shape_cast %189 : vector<1x8x1x8xf32> to vector<8x8xf32>
      %191 = vector.shape_cast %188 : vector<8x8xf32> to vector<1x8x1x8xf32>
      tpu.vector_store %arg7[%c0_153, %c0_154, %c1_155, %c0_156], %191 {strides = array<i32>} : memref<1x8x4x8xf32, #tpu.memory_space<vmem>>, vector<1x8x1x8xf32>,
      %c2_157 = arith.constant 2 : index
      %c0_158 = arith.constant 0 : index
      %c0_159 = arith.constant 0 : index
      %192 = vector.load %arg9[%c2_157, %c0_158, %c0_159] : memref<4x8x1xf32, #tpu.memory_space<vmem>>, vector<1x8x1xf32>
      %193 = vector.shape_cast %192 : vector<1x8x1xf32> to vector<8x1xf32>
      %194 = tpu.reciprocal %193 {approx = true} : vector<8x1xf32> -> vector<8x1xf32>
      %c2_160 = arith.constant 2 : index
      %c0_161 = arith.constant 0 : index
      %c0_162 = arith.constant 0 : index
      %195 = vector.load %arg10[%c2_160, %c0_161, %c0_162] : memref<4x8x8xf32, #tpu.memory_space<vmem>>, vector<1x8x8xf32>
      %196 = vector.shape_cast %195 : vector<1x8x8xf32> to vector<8x8xf32>
      %197 = vector.broadcast %194 : vector<8x1xf32> to vector<8x8xf32>
      %198 = arith.mulf %196, %197 : vector<8x8xf32>
      %c0_163 = arith.constant 0 : index
      %c0_164 = arith.constant 0 : index
      %c2_165 = arith.constant 2 : index
      %c0_166 = arith.constant 0 : index
      %199 = vector.load %arg7[%c0_163, %c0_164, %c2_165, %c0_166] : memref<1x8x4x8xf32, #tpu.memory_space<vmem>>, vector<1x8x1x8xf32>
      %200 = vector.shape_cast %199 : vector<1x8x1x8xf32> to vector<8x8xf32>
      %201 = vector.shape_cast %198 : vector<8x8xf32> to vector<1x8x1x8xf32>
      tpu.vector_store %arg7[%c0_163, %c0_164, %c2_165, %c0_166], %201 {strides = array<i32>} : memref<1x8x4x8xf32, #tpu.memory_space<vmem>>, vector<1x8x1x8xf32>,
      %c3_167 = arith.constant 3 : index
      %c0_168 = arith.constant 0 : index
      %c0_169 = arith.constant 0 : index
      %202 = vector.load %arg9[%c3_167, %c0_168, %c0_169] : memref<4x8x1xf32, #tpu.memory_space<vmem>>, vector<1x8x1xf32>
      %203 = vector.shape_cast %202 : vector<1x8x1xf32> to vector<8x1xf32>
      %204 = tpu.reciprocal %203 {approx = true} : vector<8x1xf32> -> vector<8x1xf32>
      %c3_170 = arith.constant 3 : index
      %c0_171 = arith.constant 0 : index
      %c0_172 = arith.constant 0 : index
      %205 = vector.load %arg10[%c3_170, %c0_171, %c0_172] : memref<4x8x8xf32, #tpu.memory_space<vmem>>, vector<1x8x8xf32>
      %206 = vector.shape_cast %205 : vector<1x8x8xf32> to vector<8x8xf32>
      %207 = vector.broadcast %204 : vector<8x1xf32> to vector<8x8xf32>
      %208 = arith.mulf %206, %207 : vector<8x8xf32>
      %c0_173 = arith.constant 0 : index
      %c0_174 = arith.constant 0 : index
      %c3_175 = arith.constant 3 : index
      %c0_176 = arith.constant 0 : index
      %209 = vector.load %arg7[%c0_173, %c0_174, %c3_175, %c0_176] : memref<1x8x4x8xf32, #tpu.memory_space<vmem>>, vector<1x8x1x8xf32>
      %210 = vector.shape_cast %209 : vector<1x8x1x8xf32> to vector<8x8xf32>
      %211 = vector.shape_cast %208 : vector<8x8xf32> to vector<1x8x1x8xf32>
      tpu.vector_store %arg7[%c0_173, %c0_174, %c3_175, %c0_176], %211 {strides = array<i32>} : memref<1x8x4x8xf32, #tpu.memory_space<vmem>>, vector<1x8x1x8xf32>,
    } else {
    }
    return
  }
  func.func @transform_0(%arg0: i32, %arg1: i32, %arg2: i32) -> (i32, i32, i32, i32) {
    %c0_i32 = arith.constant 0 : i32
    %c0_i32_0 = arith.constant 0 : i32
    %c0_i32_1 = arith.constant 0 : i32
    return %arg0, %c0_i32, %arg1, %c0_i32_0 : i32, i32, i32, i32
  }
  func.func @transform_1(%arg0: i32, %arg1: i32, %arg2: i32) -> (i32, i32, i32, i32) {
    %c0_i32 = arith.constant 0 : i32
    %c0_i32_0 = arith.constant 0 : i32
    %c0_i32_1 = arith.constant 0 : i32
    return %arg0, %c0_i32, %arg2, %c0_i32_0 : i32, i32, i32, i32
  }
  func.func @transform_2(%arg0: i32, %arg1: i32, %arg2: i32) -> (i32, i32, i32, i32) {
    %c0_i32 = arith.constant 0 : i32
    %c0_i32_0 = arith.constant 0 : i32
    %c0_i32_1 = arith.constant 0 : i32
    return %arg0, %c0_i32, %arg2, %c0_i32_0 : i32, i32, i32, i32
  }
  func.func @transform_3(%arg0: i32, %arg1: i32, %arg2: i32) -> (i32, i32, i32) {
    %c0_i32 = arith.constant 0 : i32
    %c0_i32_0 = arith.constant 0 : i32
    return %arg0, %c0_i32, %arg2 : i32, i32, i32
  }
  func.func @transform_4(%arg0: i32, %arg1: i32, %arg2: i32) -> (i32, i32, i32, i32) {
    %c0_i32 = arith.constant 0 : i32
    %c0_i32_0 = arith.constant 0 : i32
    %c0_i32_1 = arith.constant 0 : i32
    return %arg0, %arg1, %c0_i32, %c0_i32_0 : i32, i32, i32, i32
  }
}

</mosaic_0001>

<llo_original>
// kernel: bert_self_attention.2
$region0: #{bert_self_attention.2}
  #allocation0 [shape = 'u32[]', space=smem, size = 0x4, offset = 0x4, fixed_abs, tag = 'smem constant byte address 0x4 - core index']
  #allocation1 [shape = 'u32[144,128]{1,0:T(1,128)}', space=vmem, size = 0x12000, scoped, tag = 'internal scratch']
  %s0 = inlined_call_operand.vmem [shape: bf16[16,32], index: 0, kind: input, shape index: {}]
  %s1 = inlined_call_operand.vmem [shape: bf16[32,32], index: 1, kind: input, shape index: {}]
  %s2 = inlined_call_operand.vmem [shape: bf16[32,32], index: 2, kind: input, shape index: {}]
  %s3 = inlined_call_operand.vmem [shape: bf16[32,32], index: 3, kind: input, shape index: {}]
  %s4 = inlined_call_operand.vmem [shape: f32[1,32], index: 4, kind: input, shape index: {}]
  %s5 = inlined_call_operand.vmem [shape: f32[1,32], index: 5, kind: input, shape index: {}]
  %s6 = inlined_call_operand.vmem [shape: f32[1,32], index: 6, kind: input, shape index: {}]
  %s7 = inlined_call_operand.vmem [shape: bf16[2,4,8,8], index: 7, kind: output, shape index: {0}]
  %s8 = inlined_call_operand.vmem [shape: bf16[2,4,8,8], index: 8, kind: output, shape index: {1}]
  %s9 = inlined_call_operand.vmem [shape: bf16[2,4,8,8], index: 9, kind: output, shape index: {2}]
  %10 = xla_tuple %s7, %s8, %s9
  %s11 = sld [smem:[#allocation0]]
  $region77: #{bert_self_attention.2} parent=0
    _
  %s13 = ssub.s32 1, %s11
  %s14 = scalar_select 0, %s13, %s11
  loop: start=0, step=1, limit=4
  $region2: #{bert_self_attention.2} parent=0 // loop_pre_header
    _
  $region3: #{bert_self_attention.2} parent=0 // loop_header
    %s16 = sphi 0, %s20
    %p17 = scmp.ge.s32.totalorder %s16, 4
    %s23 = sphi 0, %s35
    %s24 = sphi 0, %s31
    %s25 = sphi 0, %s23
    %s26 = sphi 0, %s24
    %s27 = sphi 0, %s25
    %s28 = sphi 0, %s26
    %s40 = sphi 0, %s42
    %s43 = sphi 0, %s40
    %s44 = sphi 0, %s43
    %s60 = sphi 0, %s44
    %s64 = sphi 0, %s64
    %s66 = sphi 0, %s64
    %s67 = sphi 0, %s66
    %s81 = sphi 0, %s67
    %s85 = sphi 0, %s85
    %s87 = sphi 0, %s85
    %s88 = sphi 0, %s87
    %s102 = sphi 0, %s88
    %s106 = sphi 0, %s106
    %s108 = sphi 0, %s106
    %s109 = sphi 0, %s108
    %s123 = sphi 0, %s109
    %s127 = sphi 0, %s127
    %s129 = sphi 0, %s127
    %s130 = sphi 0, %s129
    %s144 = sphi 0, %s130
    %s148 = sphi 0, %s148
    %s150 = sphi 0, %s148
    %s151 = sphi 0, %s150
    %s165 = sphi 0, %s151
    %s169 = sphi 0, %s169
    %s171 = sphi 0, %s169
    %s172 = sphi 0, %s171
    %s186 = sphi 0, %s172
    %s194 = sphi 0, %s196
    %s197 = sphi 0, %s194
    %s198 = sphi 0, %s197
    %s214 = sphi 0, %s198
    %s222 = sphi 0, %s224
    %s225 = sphi 0, %s222
    %s226 = sphi 0, %s225
    %s242 = sphi 0, %s226
    %s250 = sphi 0, %s252
    %s253 = sphi 0, %s250
    %s254 = sphi 0, %s253
    %s270 = sphi 0, %s254
  $region4: #{bert_self_attention.2} parent=0 // loop_header_branch
    %19 = sbr.rel (%p17) target = $region8
  $region5: #{bert_self_attention.2} parent=0 // loop_body
    %s21 = ssub.s32 %s16, 1
    %s22 = ssub.s32 %s16, 2
    %s29 = sadd.s32 1, %s24
    %p30 = scmp.ge.s32.totalorder %s29, 1
    %s31 = scalar_select %p30, 0, %s29
    %s32 = sadd.s32 1, %s23
    %s33 = scalar_select %p30, %s32, %s23
    %p34 = scmp.ge.s32.totalorder %s33, 2
    %s35 = scalar_select %p34, 0, %s33
    %s36 = sadd.s32 %s23, %s24
    %s37 = sadd.s32 %s35, %s31
    %s38 = ssub.s32 %s36, %s37
    %p39 = scmp.eq.s32.totalorder %s38, 0
    %s41 = sadd.s32 %s40, 1
    %s42 = scalar_select %p39, %s40, %s41
    %p45 = pneg %p39
    %p46 = scmp.eq.s32.totalorder %s16, 1
    %p47 = por %p45, %p46
    %p48 = scmp.ne.s32.totalorder %s40, %s43
    %p49 = scmp.eq.s32.totalorder %s16, 0
    %p50 = por %p48, %p49
    %p51 = scmp.ne.s32.totalorder %s40, %s43
    %p52 = scmp.eq.s32.totalorder %s21, 1
    %p53 = por %p51, %p52
    %p54 = scmp.ne.s32.totalorder %s43, %s44
    %p55 = scmp.eq.s32.totalorder %s21, 0
    %p56 = por %p54, %p55
    %p57 = scmp.ne.s32.totalorder %s43, %s44
    %p58 = scmp.eq.s32.totalorder %s22, 1
    %p59 = por %p57, %p58
    %p61 = scmp.ne.s32.totalorder %s44, %s60
    %p62 = scmp.eq.s32.totalorder %s22, 0
    %p63 = por %p61, %p62
    %s65 = sadd.s32 %s64, 1
    %p68 = scmp.eq.s32.totalorder %s16, 1
    %p69 = scmp.ne.s32.totalorder %s64, %s66
    %p70 = scmp.eq.s32.totalorder %s16, 0
    %p71 = por %p69, %p70
    %p72 = scmp.ne.s32.totalorder %s64, %s66
    %p73 = scmp.eq.s32.totalorder %s21, 1
    %p74 = por %p72, %p73
    %p75 = scmp.ne.s32.totalorder %s66, %s67
    %p76 = scmp.eq.s32.totalorder %s21, 0
    %p77 = por %p75, %p76
    %p78 = scmp.ne.s32.totalorder %s66, %s67
    %p79 = scmp.eq.s32.totalorder %s22, 1
    %p80 = por %p78, %p79
    %p82 = scmp.ne.s32.totalorder %s67, %s81
    %p83 = scmp.eq.s32.totalorder %s22, 0
    %p84 = por %p82, %p83
    %s86 = sadd.s32 %s85, 1
    %p89 = scmp.eq.s32.totalorder %s16, 1
    %p90 = scmp.ne.s32.totalorder %s85, %s87
    %p91 = scmp.eq.s32.totalorder %s16, 0
    %p92 = por %p90, %p91
    %p93 = scmp.ne.s32.totalorder %s85, %s87
    %p94 = scmp.eq.s32.totalorder %s21, 1
    %p95 = por %p93, %p94
    %p96 = scmp.ne.s32.totalorder %s87, %s88
    %p97 = scmp.eq.s32.totalorder %s21, 0
    %p98 = por %p96, %p97
    %p99 = scmp.ne.s32.totalorder %s87, %s88
    %p100 = scmp.eq.s32.totalorder %s22, 1
    %p101 = por %p99, %p100
    %p103 = scmp.ne.s32.totalorder %s88, %s102
    %p104 = scmp.eq.s32.totalorder %s22, 0
    %p105 = por %p103, %p104
    %s107 = sadd.s32 %s106, 1
    %p110 = scmp.eq.s32.totalorder %s16, 1
    %p111 = scmp.ne.s32.totalorder %s106, %s108
    %p112 = scmp.eq.s32.totalorder %s16, 0
    %p113 = por %p111, %p112
    %p114 = scmp.ne.s32.totalorder %s106, %s108
    %p115 = scmp.eq.s32.totalorder %s21, 1
    %p116 = por %p114, %p115
    %p117 = scmp.ne.s32.totalorder %s108, %s109
    %p118 = scmp.eq.s32.totalorder %s21, 0
    %p119 = por %p117, %p118
    %p120 = scmp.ne.s32.totalorder %s108, %s109
    %p121 = scmp.eq.s32.totalorder %s22, 1
    %p122 = por %p120, %p121
    %p124 = scmp.ne.s32.totalorder %s109, %s123
    %p125 = scmp.eq.s32.totalorder %s22, 0
    %p126 = por %p124, %p125
    %s128 = sadd.s32 %s127, 1
    %p131 = scmp.eq.s32.totalorder %s16, 1
    %p132 = scmp.ne.s32.totalorder %s127, %s129
    %p133 = scmp.eq.s32.totalorder %s16, 0
    %p134 = por %p132, %p133
    %p135 = scmp.ne.s32.totalorder %s127, %s129
    %p136 = scmp.eq.s32.totalorder %s21, 1
    %p137 = por %p135, %p136
    %p138 = scmp.ne.s32.totalorder %s129, %s130
    %p139 = scmp.eq.s32.totalorder %s21, 0
    %p140 = por %p138, %p139
    %p141 = scmp.ne.s32.totalorder %s129, %s130
    %p142 = scmp.eq.s32.totalorder %s22, 1
    %p143 = por %p141, %p142
    %p145 = scmp.ne.s32.totalorder %s130, %s144
    %p146 = scmp.eq.s32.totalorder %s22, 0
    %p147 = por %p145, %p146
    %s149 = sadd.s32 %s148, 1
    %p152 = scmp.eq.s32.totalorder %s16, 1
    %p153 = scmp.ne.s32.totalorder %s148, %s150
    %p154 = scmp.eq.s32.totalorder %s16, 0
    %p155 = por %p153, %p154
    %p156 = scmp.ne.s32.totalorder %s148, %s150
    %p157 = scmp.eq.s32.totalorder %s21, 1
    %p158 = por %p156, %p157
    %p159 = scmp.ne.s32.totalorder %s150, %s151
    %p160 = scmp.eq.s32.totalorder %s21, 0
    %p161 = por %p159, %p160
    %p162 = scmp.ne.s32.totalorder %s150, %s151
    %p163 = scmp.eq.s32.totalorder %s22, 1
    %p164 = por %p162, %p163
    %p166 = scmp.ne.s32.totalorder %s151, %s165
    %p167 = scmp.eq.s32.totalorder %s22, 0
    %p168 = por %p166, %p167
    %s170 = sadd.s32 %s169, 1
    %p173 = scmp.eq.s32.totalorder %s16, 1
    %p174 = scmp.ne.s32.totalorder %s169, %s171
    %p175 = scmp.eq.s32.totalorder %s16, 0
    %p176 = por %p174, %p175
    %p177 = scmp.ne.s32.totalorder %s169, %s171
    %p178 = scmp.eq.s32.totalorder %s21, 1
    %p179 = por %p177, %p178
    %p180 = scmp.ne.s32.totalorder %s171, %s172
    %p181 = scmp.eq.s32.totalorder %s21, 0
    %p182 = por %p180, %p181
    %p183 = scmp.ne.s32.totalorder %s171, %s172
    %p184 = scmp.eq.s32.totalorder %s22, 1
    %p185 = por %p183, %p184
    %p187 = scmp.ne.s32.totalorder %s172, %s186
    %p188 = scmp.eq.s32.totalorder %s22, 0
    %p189 = por %p187, %p188
    %s190 = ssub.s32 %s23, %s35
    %s191 = ssub.s32 %s24, %s31
    %s192 = sor.u32 %s190, %s191
    %p193 = scmp.eq.s32.totalorder %s192, 0
    %s195 = sadd.s32 %s194, 1
    %s196 = scalar_select %p193, %s194, %s195
    %p199 = pneg %p193
    %p200 = scmp.eq.s32.totalorder %s16, 1
    %p201 = por %p199, %p200
    %p202 = scmp.ne.s32.totalorder %s194, %s197
    %p203 = scmp.eq.s32.totalorder %s16, 0
    %p204 = por %p202, %p203
    %p205 = scmp.ne.s32.totalorder %s194, %s197
    %p206 = scmp.eq.s32.totalorder %s21, 1
    %p207 = por %p205, %p206
    %p208 = scmp.ne.s32.totalorder %s197, %s198
    %p209 = scmp.eq.s32.totalorder %s21, 0
    %p210 = por %p208, %p209
    %p211 = scmp.ne.s32.totalorder %s197, %s198
    %p212 = scmp.eq.s32.totalorder %s22, 1
    %p213 = por %p211, %p212
    %p215 = scmp.ne.s32.totalorder %s198, %s214
    %p216 = scmp.eq.s32.totalorder %s22, 0
    %p217 = por %p215, %p216
    %s218 = ssub.s32 %s23, %s35
    %s219 = ssub.s32 %s24, %s31
    %s220 = sor.u32 %s218, %s219
    %p221 = scmp.eq.s32.totalorder %s220, 0
    %s223 = sadd.s32 %s222, 1
    %s224 = scalar_select %p221, %s222, %s223
    %p227 = pneg %p221
    %p228 = scmp.eq.s32.totalorder %s16, 1
    %p229 = por %p227, %p228
    %p230 = scmp.ne.s32.totalorder %s222, %s225
    %p231 = scmp.eq.s32.totalorder %s16, 0
    %p232 = por %p230, %p231
    %p233 = scmp.ne.s32.totalorder %s222, %s225
    %p234 = scmp.eq.s32.totalorder %s21, 1
    %p235 = por %p233, %p234
    %p236 = scmp.ne.s32.totalorder %s225, %s226
    %p237 = scmp.eq.s32.totalorder %s21, 0
    %p238 = por %p236, %p237
    %p239 = scmp.ne.s32.totalorder %s225, %s226
    %p240 = scmp.eq.s32.totalorder %s22, 1
    %p241 = por %p239, %p240
    %p243 = scmp.ne.s32.totalorder %s226, %s242
    %p244 = scmp.eq.s32.totalorder %s22, 0
    %p245 = por %p243, %p244
    %s246 = ssub.s32 %s23, %s35
    %s247 = ssub.s32 %s24, %s31
    %s248 = sor.u32 %s246, %s247
    %p249 = scmp.eq.s32.totalorder %s248, 0
    %s251 = sadd.s32 %s250, 1
    %s252 = scalar_select %p249, %s250, %s251
    %p255 = pneg %p249
    %p256 = scmp.eq.s32.totalorder %s16, 1
    %p257 = por %p255, %p256
    %p258 = scmp.ne.s32.totalorder %s250, %s253
    %p259 = scmp.eq.s32.totalorder %s16, 0
    %p260 = por %p258, %p259
    %p261 = scmp.ne.s32.totalorder %s250, %s253
    %p262 = scmp.eq.s32.totalorder %s21, 1
    %p263 = por %p261, %p262
    %p264 = scmp.ne.s32.totalorder %s253, %s254
    %p265 = scmp.eq.s32.totalorder %s21, 0
    %p266 = por %p264, %p265
    %p267 = scmp.ne.s32.totalorder %s253, %s254
    %p268 = scmp.eq.s32.totalorder %s22, 1
    %p269 = por %p267, %p268
    %p271 = scmp.ne.s32.totalorder %s254, %s270
    %p272 = scmp.eq.s32.totalorder %s22, 0
    %p273 = por %p271, %p272
    %p274 = scmp.le.s32.totalorder 1, %s16
    %p275 = scmp.lt.s32.totalorder %s16, 3
    %p276 = pnand %p274, %p275
    %p277 = pneg %p276
    // Predicated region
    $region9: #{bert_self_attention.2} parent=5 // pred_check
      _
    $region10: #{bert_self_attention.2} parent=5 // pred_check_branch
      %279 = sbr.rel (%p276) target = $region12
    $region11: #{bert_self_attention.2} parent=5 // pred_region
      %s280 = ssub.s32 %s16, 1
      // Predicated region
      $region13: #{bert_self_attention.2} parent=11 // pred_check
        %p281 = pneg %p77
      $region14: #{bert_self_attention.2} parent=11 // pred_check_branch
        %283 = sbr.rel (%p281) target = $region16
      $region15: #{bert_self_attention.2} parent=11 // pred_region
        _
      $region16: #{bert_self_attention.2} parent=11 // pred_fallthru
        _
      // Predicated region
      $region17: #{bert_self_attention.2} parent=11 // pred_check
        %p284 = pneg %p98
      $region18: #{bert_self_attention.2} parent=11 // pred_check_branch
        %286 = sbr.rel (%p284) target = $region20
      $region19: #{bert_self_attention.2} parent=11 // pred_region
        _
      $region20: #{bert_self_attention.2} parent=11 // pred_fallthru
        _
      // Predicated region
      $region21: #{bert_self_attention.2} parent=11 // pred_check
        %p287 = pneg %p119
      $region22: #{bert_self_attention.2} parent=11 // pred_check_branch
        %289 = sbr.rel (%p287) target = $region24
      $region23: #{bert_self_attention.2} parent=11 // pred_region
        _
      $region24: #{bert_self_attention.2} parent=11 // pred_fallthru
        _
      // Predicated region
      $region25: #{bert_self_attention.2} parent=11 // pred_check
        %p290 = pneg %p140
      $region26: #{bert_self_attention.2} parent=11 // pred_check_branch
        %292 = sbr.rel (%p290) target = $region28
      $region27: #{bert_self_attention.2} parent=11 // pred_region
        _
      $region28: #{bert_self_attention.2} parent=11 // pred_fallthru
        _
      // Predicated region
      $region29: #{bert_self_attention.2} parent=11 // pred_check
        %p293 = pneg %p161
      $region30: #{bert_self_attention.2} parent=11 // pred_check_branch
        %295 = sbr.rel (%p293) target = $region32
      $region31: #{bert_self_attention.2} parent=11 // pred_region
        _
      $region32: #{bert_self_attention.2} parent=11 // pred_fallthru
        _
      // Predicated region
      $region33: #{bert_self_attention.2} parent=11 // pred_check
        %p296 = pneg %p182
      $region34: #{bert_self_attention.2} parent=11 // pred_check_branch
        %298 = sbr.rel (%p296) target = $region36
      $region35: #{bert_self_attention.2} parent=11 // pred_region
        _
      $region36: #{bert_self_attention.2} parent=11 // pred_fallthru
        _
    $region12: #{bert_self_attention.2} parent=5 // pred_fallthru
      _
    %p299 = scmp.lt.s32.totalorder %s16, 2
    // Predicated region
    $region37: #{bert_self_attention.2} parent=5 // pred_check
      %p300 = pneg %p299
    $region38: #{bert_self_attention.2} parent=5 // pred_check_branch
      %302 = sbr.rel (%p300) target = $region40
    $region39: #{bert_self_attention.2} parent=5 // pred_region
      // Predicated region
      $region41: #{bert_self_attention.2} parent=39 // pred_check
        %p303 = pneg %p50
      $region42: #{bert_self_attention.2} parent=39 // pred_check_branch
        %305 = sbr.rel (%p303) target = $region44
      $region43: #{bert_self_attention.2} parent=39 // pred_region
        %s306 = sadd.s32 %s23, %s24
        %p307 = scmp.lt.s32.totalorder %s306, 1
        %s308 = scalar_select %p307, %s306, 1
        %s309 = smul.addr %s308, 4
        %s310 = scalar_lea.vmem %s0, %s309
        %s311 = sadd.s32 %s23, %s24
      $region44: #{bert_self_attention.2} parent=39 // pred_fallthru
        _
    $region40: #{bert_self_attention.2} parent=5 // pred_fallthru
      _
    %p312 = scmp.le.s32.totalorder 1, %s16
    %p313 = scmp.lt.s32.totalorder %s16, 3
    %p314 = pnand %p312, %p313
    %p315 = pneg %p314
    // Predicated region
    $region45: #{bert_self_attention.2} parent=5 // pred_check
      _
    $region46: #{bert_self_attention.2} parent=5 // pred_check_branch
      %317 = sbr.rel (%p314) target = $region48
    $region47: #{bert_self_attention.2} parent=5 // pred_region
      %s318 = ssub.s32 %s16, 1
      %s319 = sadd.s32 %s25, %s26
      %p320 = scmp.lt.s32.totalorder %s319, 1
      %s321 = scalar_select %p320, %s319, 1
      %s322 = smul.addr %s321, 4
      %s323 = scalar_lea.vmem %s0, %s322
      %p324 = pneg %p56
      %p325 = pneg %p53
      %p326 = pneg %p77
      %p327 = pneg %p74
      %p328 = pneg %p98
      %p329 = pneg %p95
      %p330 = pneg %p119
      %p331 = pneg %p116
      %p332 = pneg %p140
      %p333 = pneg %p137
      %p334 = pneg %p161
      %p335 = pneg %p158
      %p336 = pneg %p182
      %p337 = pneg %p179
      %p338 = pneg %p210
      %p339 = pneg %p207
      %p340 = scmp.lt.s32.totalorder %s25, 1
      %s341 = scalar_select %p340, %s25, 1
      %p342 = scmp.lt.s32.totalorder %s26, 0
      %s343 = scalar_select %p342, %s26, 0
      %s344 = smul.addr %s341, 4
      %s345 = sadd.s32 %s343, %s344
      %s346 = smul.addr %s345, 4
      %s347 = scalar_lea.vmem %s7, %s346
      %p348 = pneg %p238
      %p349 = pneg %p235
      %p350 = scmp.lt.s32.totalorder %s25, 1
      %s351 = scalar_select %p350, %s25, 1
      %p352 = scmp.lt.s32.totalorder %s26, 0
      %s353 = scalar_select %p352, %s26, 0
      %s354 = smul.addr %s351, 4
      %s355 = sadd.s32 %s353, %s354
      %s356 = smul.addr %s355, 4
      %s357 = scalar_lea.vmem %s8, %s356
      %p358 = pneg %p266
      %p359 = pneg %p263
      %p360 = scmp.lt.s32.totalorder %s25, 1
      %s361 = scalar_select %p360, %s25, 1
      %p362 = scmp.lt.s32.totalorder %s26, 0
      %s363 = scalar_select %p362, %s26, 0
      %s364 = smul.addr %s361, 4
      %s365 = sadd.s32 %s363, %s364
      %s366 = smul.addr %s365, 4
      %s367 = scalar_lea.vmem %s9, %s366
      %s368 = sadd.s32 %s25, %s26
      %p369 = scmp.lt.s32.totalorder %s368, 1
      %s370 = scalar_select %p369, %s368, 1
      %s371 = smul.addr %s370, 4
      %s372 = scalar_lea.vmem %s0, %s371
      %s373 = sadd.s32 %s25, %s26
      %p374 = scmp.lt.s32.totalorder %s25, 1
      %s375 = scalar_select %p374, %s25, 1
      %p376 = scmp.lt.s32.totalorder %s26, 0
      %s377 = scalar_select %p376, %s26, 0
      %s378 = smul.addr %s375, 4
      %s379 = sadd.s32 %s377, %s378
      %s380 = smul.addr %s379, 4
      %s381 = scalar_lea.vmem %s7, %s380
      %p382 = scmp.lt.s32.totalorder %s25, 1
      %s383 = scalar_select %p382, %s25, 1
      %p384 = scmp.lt.s32.totalorder %s26, 0
      %s385 = scalar_select %p384, %s26, 0
      %s386 = smul.addr %s383, 4
      %s387 = sadd.s32 %s385, %s386
      %s388 = smul.addr %s387, 4
      %s389 = scalar_lea.vmem %s8, %s388
      %p390 = scmp.lt.s32.totalorder %s25, 1
      %s391 = scalar_select %p390, %s25, 1
      %p392 = scmp.lt.s32.totalorder %s26, 0
      %s393 = scalar_select %p392, %s26, 0
      %s394 = smul.addr %s391, 4
      %s395 = sadd.s32 %s393, %s394
      %s396 = smul.addr %s395, 4
      %s397 = scalar_lea.vmem %s9, %s396
      %v399 = vld [vmem:[%s372] sm:$0xf]
      %v400 = vld [vmem:[%s1] sm:$0xf]
      %v401 = vld [vmem:[%s1 + $0x4] sm:$0xf]
      %v402 = vld [vmem:[%s1 + $0x8] sm:$0xf]
      %v403 = vld [vmem:[%s1 + $0xc] sm:$0xf]
      %v404 = vld [vmem:[%s4] sm:$0x1]
      %v406 = vlaneseq
      %v407 = vshrl.u32 %v406, 7
      %v408 = vsub.s32 0, %v407
      %v409 = vrot.slane %v404, %v408
      %v415 = vunpack.c.l.b16 %v400
      %v416 = vunpack.c.l.b16 %v401
      %v417 = vunpack.c.l.b16 %v402
      %v418 = vunpack.c.l.b16 %v403
      %v419 = vpack.c.b16 %v416, %v415
      %v420 = vpack.c.b16 %v418, %v417
      %vm423 = vcmask 261120
      %v425 = vsel %vm423, %v399, 0
      %427 = vmatprep.subr.bf16.mxu0 0
      %428 = vmatpush1.bf16.msra.mxu0 %v419
      %429 = vmatprep.subr.bf16.mxu0 0
      %430 = vmatpush1.bf16.msra.mxu0 %v420
      %431 = vmatprep.subr.bf16.mxu0 0
      %432 = vmatpush1.bf16.msra.mxu0 0
      %433 = vmatprep.subr.bf16.mxu0 0
      %434 = vmatpush1.bf16.msra.mxu0 0
      %435 = vmatprep.subr.bf16.mxu0 0
      %436 = vmatpush1.bf16.msra.mxu0 0
      %437 = vmatprep.subr.bf16.mxu0 0
      %438 = vmatpush1.bf16.msra.mxu0 0
      %439 = vmatprep.subr.bf16.mxu0 0
      %440 = vmatpush1.bf16.msra.mxu0 0
      %441 = vmatprep.subr.bf16.mxu0 0
      %442 = vmatpush1.bf16.msra.mxu0 0
      %443 = vmatprep.subr.bf16.mxu0 0
      %444 = vmatpush1.bf16.msra.mxu0 0
      %445 = vmatprep.subr.bf16.mxu0 0
      %446 = vmatpush1.bf16.msra.mxu0 0
      %447 = vmatprep.subr.bf16.mxu0 0
      %448 = vmatpush1.bf16.msra.mxu0 0
      %449 = vmatprep.subr.bf16.mxu0 0
      %450 = vmatpush1.bf16.msra.mxu0 0
      %451 = vmatprep.subr.bf16.mxu0 0
      %452 = vmatpush1.bf16.msra.mxu0 0
      %453 = vmatprep.subr.bf16.mxu0 0
      %454 = vmatpush1.bf16.msra.mxu0 0
      %455 = vmatprep.subr.bf16.mxu0 0
      %456 = vmatpush1.bf16.msra.mxu0 0
      %457 = vmatprep.subr.bf16.mxu0 0
      %458 = vmatpush1.bf16.msra.mxu0 0
      %459 = vmatprep.mubr.bf16.mxu0 0
      %460 = vmatmul.mubr.bf16.gmra.mrb[0].mxu0 %v425
      %v461 = vpop.f32.mrb[0].mxu0
      %v462 = vadd.f32 %v409, %v461
      %v463 = vpop.f32.mrb[0].mxu0
      %v464 = vpop.f32.mrb[0].mxu0
      %v465 = vpop.f32.mrb[0].mxu0
      %466 = vdwg.mxu0
      %v467 = vpack.c.bf16 %v462, %v462
      %vm468 = vcmask 60416
      %469 = vst.msk [vmem:[%s381] sm:$0xf] %vm468, %v467
      %v471 = vunpack.c.l.b16 %v467
      %v472 = vpack.c.b16 %v471, %v471
      %473 = vrot.lane.b32.xlu0 %v472, 120
      %v474 = vpop.permute.xlu0 %473
      %s476 = scalar_lea.vmem %s381, 4
      %477 = vst.msk [vmem:[%s476] sm:$0xf] %vm468, %v474
      %478 = vrot.lane.b32.xlu0 %v472, 112
      %v479 = vpop.permute.xlu0 %478
      %s481 = scalar_lea.vmem %s381, 8
      %482 = vst.msk [vmem:[%s481] sm:$0xf] %vm468, %v479
      %483 = vrot.lane.b32.xlu0 %v472, 104
      %v484 = vpop.permute.xlu0 %483
      %s486 = scalar_lea.vmem %s381, 12
      %487 = vst.msk [vmem:[%s486] sm:$0xf] %vm468, %v484
      %v488 = vld [vmem:[%s2] sm:$0xf]
      %v489 = vld [vmem:[%s2 + $0x4] sm:$0xf]
      %v490 = vld [vmem:[%s2 + $0x8] sm:$0xf]
      %v491 = vld [vmem:[%s2 + $0xc] sm:$0xf]
      %v492 = vld [vmem:[%s5] sm:$0x1]
      %v494 = vlaneseq
      %v495 = vshrl.u32 %v494, 7
      %v496 = vsub.s32 0, %v495
      %v497 = vrot.slane %v492, %v496
      %v503 = vunpack.c.l.b16 %v488
      %v504 = vunpack.c.l.b16 %v489
      %v505 = vunpack.c.l.b16 %v490
      %v506 = vunpack.c.l.b16 %v491
      %v507 = vpack.c.b16 %v504, %v503
      %v508 = vpack.c.b16 %v506, %v505
      %511 = vmatprep.subr.bf16.mxu0 0
      %512 = vmatpush1.bf16.msra.mxu0 %v507
      %513 = vmatprep.subr.bf16.mxu0 0
      %514 = vmatpush1.bf16.msra.mxu0 %v508
      %515 = vmatprep.subr.bf16.mxu0 0
      %516 = vmatpush1.bf16.msra.mxu0 0
      %517 = vmatprep.subr.bf16.mxu0 0
      %518 = vmatpush1.bf16.msra.mxu0 0
      %519 = vmatprep.subr.bf16.mxu0 0
      %520 = vmatpush1.bf16.msra.mxu0 0
      %521 = vmatprep.subr.bf16.mxu0 0
      %522 = vmatpush1.bf16.msra.mxu0 0
      %523 = vmatprep.subr.bf16.mxu0 0
      %524 = vmatpush1.bf16.msra.mxu0 0
      %525 = vmatprep.subr.bf16.mxu0 0
      %526 = vmatpush1.bf16.msra.mxu0 0
      %527 = vmatprep.subr.bf16.mxu0 0
      %528 = vmatpush1.bf16.msra.mxu0 0
      %529 = vmatprep.subr.bf16.mxu0 0
      %530 = vmatpush1.bf16.msra.mxu0 0
      %531 = vmatprep.subr.bf16.mxu0 0
      %532 = vmatpush1.bf16.msra.mxu0 0
      %533 = vmatprep.subr.bf16.mxu0 0
      %534 = vmatpush1.bf16.msra.mxu0 0
      %535 = vmatprep.subr.bf16.mxu0 0
      %536 = vmatpush1.bf16.msra.mxu0 0
      %537 = vmatprep.subr.bf16.mxu0 0
      %538 = vmatpush1.bf16.msra.mxu0 0
      %539 = vmatprep.subr.bf16.mxu0 0
      %540 = vmatpush1.bf16.msra.mxu0 0
      %541 = vmatprep.subr.bf16.mxu0 0
      %542 = vmatpush1.bf16.msra.mxu0 0
      %543 = vmatprep.mubr.bf16.mxu0 0
      %544 = vmatmul.mubr.bf16.gmra.mrb[0].mxu0 %v425
      %v545 = vpop.f32.mrb[0].mxu0
      %v546 = vadd.f32 %v497, %v545
      %v547 = vpop.f32.mrb[0].mxu0
      %v548 = vpop.f32.mrb[0].mxu0
      %v549 = vpop.f32.mrb[0].mxu0
      %550 = vdwg.mxu0
      %v551 = vpack.c.bf16 %v546, %v546
      %552 = vst.msk [vmem:[%s389] sm:$0xf] %vm468, %v551
      %v554 = vunpack.c.l.b16 %v551
      %v555 = vpack.c.b16 %v554, %v554
      %556 = vrot.lane.b32.xlu0 %v555, 120
      %v557 = vpop.permute.xlu0 %556
      %s559 = scalar_lea.vmem %s389, 4
      %560 = vst.msk [vmem:[%s559] sm:$0xf] %vm468, %v557
      %561 = vrot.lane.b32.xlu0 %v555, 112
      %v562 = vpop.permute.xlu0 %561
      %s564 = scalar_lea.vmem %s389, 8
      %565 = vst.msk [vmem:[%s564] sm:$0xf] %vm468, %v562
      %566 = vrot.lane.b32.xlu0 %v555, 104
      %v567 = vpop.permute.xlu0 %566
      %s569 = scalar_lea.vmem %s389, 12
      %570 = vst.msk [vmem:[%s569] sm:$0xf] %vm468, %v567
      %v571 = vld [vmem:[%s3] sm:$0xf]
      %v572 = vld [vmem:[%s3 + $0x4] sm:$0xf]
      %v573 = vld [vmem:[%s3 + $0x8] sm:$0xf]
      %v574 = vld [vmem:[%s3 + $0xc] sm:$0xf]
      %v575 = vld [vmem:[%s6] sm:$0x1]
      %v577 = vlaneseq
      %v578 = vshrl.u32 %v577, 7
      %v579 = vsub.s32 0, %v578
      %v580 = vrot.slane %v575, %v579
      %v586 = vunpack.c.l.b16 %v571
      %v587 = vunpack.c.l.b16 %v572
      %v588 = vunpack.c.l.b16 %v573
      %v589 = vunpack.c.l.b16 %v574
      %v590 = vpack.c.b16 %v587, %v586
      %v591 = vpack.c.b16 %v589, %v588
      %594 = vmatprep.subr.bf16.mxu0 0
      %595 = vmatpush1.bf16.msra.mxu0 %v590
      %596 = vmatprep.subr.bf16.mxu0 0
      %597 = vmatpush1.bf16.msra.mxu0 %v591
      %598 = vmatprep.subr.bf16.mxu0 0
      %599 = vmatpush1.bf16.msra.mxu0 0
      %600 = vmatprep.subr.bf16.mxu0 0
      %601 = vmatpush1.bf16.msra.mxu0 0
      %602 = vmatprep.subr.bf16.mxu0 0
      %603 = vmatpush1.bf16.msra.mxu0 0
      %604 = vmatprep.subr.bf16.mxu0 0
      %605 = vmatpush1.bf16.msra.mxu0 0
      %606 = vmatprep.subr.bf16.mxu0 0
      %607 = vmatpush1.bf16.msra.mxu0 0
      %608 = vmatprep.subr.bf16.mxu0 0
      %609 = vmatpush1.bf16.msra.mxu0 0
      %610 = vmatprep.subr.bf16.mxu0 0
      %611 = vmatpush1.bf16.msra.mxu0 0
      %612 = vmatprep.subr.bf16.mxu0 0
      %613 = vmatpush1.bf16.msra.mxu0 0
      %614 = vmatprep.subr.bf16.mxu0 0
      %615 = vmatpush1.bf16.msra.mxu0 0
      %616 = vmatprep.subr.bf16.mxu0 0
      %617 = vmatpush1.bf16.msra.mxu0 0
      %618 = vmatprep.subr.bf16.mxu0 0
      %619 = vmatpush1.bf16.msra.mxu0 0
      %620 = vmatprep.subr.bf16.mxu0 0
      %621 = vmatpush1.bf16.msra.mxu0 0
      %622 = vmatprep.subr.bf16.mxu0 0
      %623 = vmatpush1.bf16.msra.mxu0 0
      %624 = vmatprep.subr.bf16.mxu0 0
      %625 = vmatpush1.bf16.msra.mxu0 0
      %626 = vmatprep.mubr.bf16.mxu0 0
      %627 = vmatmul.mubr.bf16.gmra.mrb[0].mxu0 %v425
      %v628 = vpop.f32.mrb[0].mxu0
      %v629 = vadd.f32 %v580, %v628
      %v630 = vpop.f32.mrb[0].mxu0
      %v631 = vpop.f32.mrb[0].mxu0
      %v632 = vpop.f32.mrb[0].mxu0
      %633 = vdwg.mxu0
      %v634 = vpack.c.bf16 %v629, %v629
      %635 = vst.msk [vmem:[%s397] sm:$0xf] %vm468, %v634
      %v637 = vunpack.c.l.b16 %v634
      %v638 = vpack.c.b16 %v637, %v637
      %639 = vrot.lane.b32.xlu0 %v638, 120
      %v640 = vpop.permute.xlu0 %639
      %s642 = scalar_lea.vmem %s397, 4
      %643 = vst.msk [vmem:[%s642] sm:$0xf] %vm468, %v640
      %644 = vrot.lane.b32.xlu0 %v638, 112
      %v645 = vpop.permute.xlu0 %644
      %s647 = scalar_lea.vmem %s397, 8
      %648 = vst.msk [vmem:[%s647] sm:$0xf] %vm468, %v645
      %649 = vrot.lane.b32.xlu0 %v638, 104
      %v650 = vpop.permute.xlu0 %649
      %s652 = scalar_lea.vmem %s397, 12
      %653 = vst.msk [vmem:[%s652] sm:$0xf] %vm468, %v650
      %p654 = scmp.lt.s32.totalorder %s25, 1
      %s655 = scalar_select %p654, %s25, 1
      %p656 = scmp.lt.s32.totalorder %s26, 0
      %s657 = scalar_select %p656, %s26, 0
      %s658 = smul.addr %s655, 4
      %s659 = sadd.s32 %s657, %s658
      %s660 = smul.addr %s659, 4
      %s661 = scalar_lea.vmem %s7, %s660
      %p662 = scmp.lt.s32.totalorder %s25, 1
      %s663 = scalar_select %p662, %s25, 1
      %p664 = scmp.lt.s32.totalorder %s26, 0
      %s665 = scalar_select %p664, %s26, 0
      %s666 = smul.addr %s663, 4
      %s667 = sadd.s32 %s665, %s666
      %s668 = smul.addr %s667, 4
      %s669 = scalar_lea.vmem %s8, %s668
      %p670 = scmp.lt.s32.totalorder %s25, 1
      %s671 = scalar_select %p670, %s25, 1
      %p672 = scmp.lt.s32.totalorder %s26, 0
      %s673 = scalar_select %p672, %s26, 0
      %s674 = smul.addr %s671, 4
      %s675 = sadd.s32 %s673, %s674
      %s676 = smul.addr %s675, 4
      %s677 = scalar_lea.vmem %s9, %s676
      // Predicated region
      $region49: #{bert_self_attention.2} parent=47 // pred_check
        %p678 = pneg %p207
      $region50: #{bert_self_attention.2} parent=47 // pred_check_branch
        %680 = sbr.rel (%p678) target = $region52
      $region51: #{bert_self_attention.2} parent=47 // pred_region
        _
      $region52: #{bert_self_attention.2} parent=47 // pred_fallthru
        _
      // Predicated region
      $region53: #{bert_self_attention.2} parent=47 // pred_check
        %p681 = pneg %p235
      $region54: #{bert_self_attention.2} parent=47 // pred_check_branch
        %683 = sbr.rel (%p681) target = $region56
      $region55: #{bert_self_attention.2} parent=47 // pred_region
        _
      $region56: #{bert_self_attention.2} parent=47 // pred_fallthru
        _
      // Predicated region
      $region57: #{bert_self_attention.2} parent=47 // pred_check
        %p684 = pneg %p263
      $region58: #{bert_self_attention.2} parent=47 // pred_check_branch
        %686 = sbr.rel (%p684) target = $region60
      $region59: #{bert_self_attention.2} parent=47 // pred_region
        _
      $region60: #{bert_self_attention.2} parent=47 // pred_fallthru
        _
    $region48: #{bert_self_attention.2} parent=5 // pred_fallthru
      _
    %p687 = scmp.le.s32.totalorder 2, %s16
    // Predicated region
    $region61: #{bert_self_attention.2} parent=5 // pred_check
      %p688 = pneg %p687
    $region62: #{bert_self_attention.2} parent=5 // pred_check_branch
      %690 = sbr.rel (%p688) target = $region64
    $region63: #{bert_self_attention.2} parent=5 // pred_region
      %s691 = ssub.s32 %s16, 2
      // Predicated region
      $region65: #{bert_self_attention.2} parent=63 // pred_check
        %p692 = pneg %p213
      $region66: #{bert_self_attention.2} parent=63 // pred_check_branch
        %694 = sbr.rel (%p692) target = $region68
      $region67: #{bert_self_attention.2} parent=63 // pred_region
        %p695 = scmp.lt.s32.totalorder %s27, 1
        %s696 = scalar_select %p695, %s27, 1
        %p697 = scmp.lt.s32.totalorder %s28, 0
        %s698 = scalar_select %p697, %s28, 0
        %s699 = smul.addr %s696, 4
        %s700 = sadd.s32 %s698, %s699
        %s701 = smul.addr %s700, 4
        %s702 = scalar_lea.vmem %s7, %s701
      $region68: #{bert_self_attention.2} parent=63 // pred_fallthru
        _
      // Predicated region
      $region69: #{bert_self_attention.2} parent=63 // pred_check
        %p703 = pneg %p241
      $region70: #{bert_self_attention.2} parent=63 // pred_check_branch
        %705 = sbr.rel (%p703) target = $region72
      $region71: #{bert_self_attention.2} parent=63 // pred_region
        %p706 = scmp.lt.s32.totalorder %s27, 1
        %s707 = scalar_select %p706, %s27, 1
        %p708 = scmp.lt.s32.totalorder %s28, 0
        %s709 = scalar_select %p708, %s28, 0
        %s710 = smul.addr %s707, 4
        %s711 = sadd.s32 %s709, %s710
        %s712 = smul.addr %s711, 4
        %s713 = scalar_lea.vmem %s8, %s712
      $region72: #{bert_self_attention.2} parent=63 // pred_fallthru
        _
      // Predicated region
      $region73: #{bert_self_attention.2} parent=63 // pred_check
        %p714 = pneg %p269
      $region74: #{bert_self_attention.2} parent=63 // pred_check_branch
        %716 = sbr.rel (%p714) target = $region76
      $region75: #{bert_self_attention.2} parent=63 // pred_region
        %p717 = scmp.lt.s32.totalorder %s27, 1
        %s718 = scalar_select %p717, %s27, 1
        %p719 = scmp.lt.s32.totalorder %s28, 0
        %s720 = scalar_select %p719, %s28, 0
        %s721 = smul.addr %s718, 4
        %s722 = sadd.s32 %s720, %s721
        %s723 = smul.addr %s722, 4
        %s724 = scalar_lea.vmem %s9, %s723
      $region76: #{bert_self_attention.2} parent=63 // pred_fallthru
        _
    $region64: #{bert_self_attention.2} parent=5 // pred_fallthru
      _
  $region6: #{bert_self_attention.2} parent=0 // loop_footer
    %s20 = sadd.s32 1, %s16
  $region7: #{bert_self_attention.2} parent=0 // loop_footer_branch
    %15 = sbr.rel target = $region3
  $region8: #{bert_self_attention.2} parent=0 // loop_exit
    _

// kernel: bert_self_attention.3
$region0: #{bert_self_attention.3}
  #allocation0 [shape = 'u32[]', space=smem, size = 0x4, offset = 0x4, fixed_abs, tag = 'smem constant byte address 0x4 - core index']
  #allocation1 [shape = 'u32[144,128]{1,0:T(1,128)}', space=vmem, size = 0x12000, scoped, tag = 'internal scratch']
  #allocation2 [shape = 'f32[4,8,1]{2,1,0:T(8,128)}', space=vmem, size = 0x4000, scoped, tag = 'scratch operand']
  #allocation3 [shape = 'f32[4,8,1]{2,1,0:T(8,128)}', space=vmem, size = 0x4000, scoped, tag = 'scratch operand']
  #allocation4 [shape = 'f32[4,8,8]{2,1,0:T(8,128)}', space=vmem, size = 0x4000, scoped, tag = 'scratch operand']
  %s0 = inlined_call_operand.vmem [shape: bf16[2,4,8,8], index: 0, kind: input, shape index: {}]
  %s1 = inlined_call_operand.vmem [shape: bf16[2,4,8,8], index: 1, kind: input, shape index: {}]
  %s2 = inlined_call_operand.vmem [shape: bf16[2,4,8,8], index: 2, kind: input, shape index: {}]
  %s3 = inlined_call_operand.vmem [shape: f32[2,1,8], index: 3, kind: input, shape index: {}]
  %s4 = inlined_call_operand.vmem [shape: f32[2,8,4,8], index: 4, kind: output, shape index: {}]
  %s5 = sld [smem:[#allocation0]]
  $region57: #{bert_self_attention.3} parent=0
    _
  %s7 = ssub.s32 1, %s5
  %s8 = scalar_select 0, %s7, %s5
  loop: start=0, step=1, limit=4
  $region2: #{bert_self_attention.3} parent=0 // loop_pre_header
    _
  $region3: #{bert_self_attention.3} parent=0 // loop_header
    %s10 = sphi 0, %s14
    %p11 = scmp.ge.s32.totalorder %s10, 4
    %s17 = sphi 0, %s36
    %s18 = sphi 0, %s32
    %s19 = sphi 0, %s28
    %s20 = sphi 0, %s17
    %s21 = sphi 0, %s18
    %s22 = sphi 0, %s19
    %s23 = sphi 0, %s20
    %s24 = sphi 0, %s21
    %s25 = sphi 0, %s22
    %s41 = sphi 0, %s43
    %s44 = sphi 0, %s41
    %s45 = sphi 0, %s44
    %s61 = sphi 0, %s45
    %s69 = sphi 0, %s71
    %s72 = sphi 0, %s69
    %s73 = sphi 0, %s72
    %s89 = sphi 0, %s73
    %s97 = sphi 0, %s99
    %s100 = sphi 0, %s97
    %s101 = sphi 0, %s100
    %s117 = sphi 0, %s101
    %s125 = sphi 0, %s127
    %s128 = sphi 0, %s125
    %s129 = sphi 0, %s128
    %s145 = sphi 0, %s129
    %s153 = sphi 0, %s155
    %s156 = sphi 0, %s153
    %s157 = sphi 0, %s156
    %s173 = sphi 0, %s157
  $region4: #{bert_self_attention.3} parent=0 // loop_header_branch
    %13 = sbr.rel (%p11) target = $region8
  $region5: #{bert_self_attention.3} parent=0 // loop_body
    %s15 = ssub.s32 %s10, 1
    %s16 = ssub.s32 %s10, 2
    %s26 = sadd.s32 1, %s19
    %p27 = scmp.ge.s32.totalorder %s26, 1
    %s28 = scalar_select %p27, 0, %s26
    %s29 = sadd.s32 1, %s18
    %s30 = scalar_select %p27, %s29, %s18
    %p31 = scmp.ge.s32.totalorder %s30, 1
    %s32 = scalar_select %p31, 0, %s30
    %s33 = sadd.s32 1, %s17
    %s34 = scalar_select %p31, %s33, %s17
    %p35 = scmp.ge.s32.totalorder %s34, 2
    %s36 = scalar_select %p35, 0, %s34
    %s37 = ssub.s32 %s17, %s36
    %s38 = ssub.s32 %s18, %s32
    %s39 = sor.u32 %s37, %s38
    %p40 = scmp.eq.s32.totalorder %s39, 0
    %s42 = sadd.s32 %s41, 1
    %s43 = scalar_select %p40, %s41, %s42
    %p46 = pneg %p40
    %p47 = scmp.eq.s32.totalorder %s10, 1
    %p48 = por %p46, %p47
    %p49 = scmp.ne.s32.totalorder %s41, %s44
    %p50 = scmp.eq.s32.totalorder %s10, 0
    %p51 = por %p49, %p50
    %p52 = scmp.ne.s32.totalorder %s41, %s44
    %p53 = scmp.eq.s32.totalorder %s15, 1
    %p54 = por %p52, %p53
    %p55 = scmp.ne.s32.totalorder %s44, %s45
    %p56 = scmp.eq.s32.totalorder %s15, 0
    %p57 = por %p55, %p56
    %p58 = scmp.ne.s32.totalorder %s44, %s45
    %p59 = scmp.eq.s32.totalorder %s16, 1
    %p60 = por %p58, %p59
    %p62 = scmp.ne.s32.totalorder %s45, %s61
    %p63 = scmp.eq.s32.totalorder %s16, 0
    %p64 = por %p62, %p63
    %s65 = ssub.s32 %s17, %s36
    %s66 = ssub.s32 %s19, %s28
    %s67 = sor.u32 %s65, %s66
    %p68 = scmp.eq.s32.totalorder %s67, 0
    %s70 = sadd.s32 %s69, 1
    %s71 = scalar_select %p68, %s69, %s70
    %p74 = pneg %p68
    %p75 = scmp.eq.s32.totalorder %s10, 1
    %p76 = por %p74, %p75
    %p77 = scmp.ne.s32.totalorder %s69, %s72
    %p78 = scmp.eq.s32.totalorder %s10, 0
    %p79 = por %p77, %p78
    %p80 = scmp.ne.s32.totalorder %s69, %s72
    %p81 = scmp.eq.s32.totalorder %s15, 1
    %p82 = por %p80, %p81
    %p83 = scmp.ne.s32.totalorder %s72, %s73
    %p84 = scmp.eq.s32.totalorder %s15, 0
    %p85 = por %p83, %p84
    %p86 = scmp.ne.s32.totalorder %s72, %s73
    %p87 = scmp.eq.s32.totalorder %s16, 1
    %p88 = por %p86, %p87
    %p90 = scmp.ne.s32.totalorder %s73, %s89
    %p91 = scmp.eq.s32.totalorder %s16, 0
    %p92 = por %p90, %p91
    %s93 = ssub.s32 %s17, %s36
    %s94 = ssub.s32 %s19, %s28
    %s95 = sor.u32 %s93, %s94
    %p96 = scmp.eq.s32.totalorder %s95, 0
    %s98 = sadd.s32 %s97, 1
    %s99 = scalar_select %p96, %s97, %s98
    %p102 = pneg %p96
    %p103 = scmp.eq.s32.totalorder %s10, 1
    %p104 = por %p102, %p103
    %p105 = scmp.ne.s32.totalorder %s97, %s100
    %p106 = scmp.eq.s32.totalorder %s10, 0
    %p107 = por %p105, %p106
    %p108 = scmp.ne.s32.totalorder %s97, %s100
    %p109 = scmp.eq.s32.totalorder %s15, 1
    %p110 = por %p108, %p109
    %p111 = scmp.ne.s32.totalorder %s100, %s101
    %p112 = scmp.eq.s32.totalorder %s15, 0
    %p113 = por %p111, %p112
    %p114 = scmp.ne.s32.totalorder %s100, %s101
    %p115 = scmp.eq.s32.totalorder %s16, 1
    %p116 = por %p114, %p115
    %p118 = scmp.ne.s32.totalorder %s101, %s117
    %p119 = scmp.eq.s32.totalorder %s16, 0
    %p120 = por %p118, %p119
    %s121 = ssub.s32 %s17, %s36
    %s122 = ssub.s32 %s19, %s28
    %s123 = sor.u32 %s121, %s122
    %p124 = scmp.eq.s32.totalorder %s123, 0
    %s126 = sadd.s32 %s125, 1
    %s127 = scalar_select %p124, %s125, %s126
    %p130 = pneg %p124
    %p131 = scmp.eq.s32.totalorder %s10, 1
    %p132 = por %p130, %p131
    %p133 = scmp.ne.s32.totalorder %s125, %s128
    %p134 = scmp.eq.s32.totalorder %s10, 0
    %p135 = por %p133, %p134
    %p136 = scmp.ne.s32.totalorder %s125, %s128
    %p137 = scmp.eq.s32.totalorder %s15, 1
    %p138 = por %p136, %p137
    %p139 = scmp.ne.s32.totalorder %s128, %s129
    %p140 = scmp.eq.s32.totalorder %s15, 0
    %p141 = por %p139, %p140
    %p142 = scmp.ne.s32.totalorder %s128, %s129
    %p143 = scmp.eq.s32.totalorder %s16, 1
    %p144 = por %p142, %p143
    %p146 = scmp.ne.s32.totalorder %s129, %s145
    %p147 = scmp.eq.s32.totalorder %s16, 0
    %p148 = por %p146, %p147
    %s149 = ssub.s32 %s17, %s36
    %s150 = ssub.s32 %s18, %s32
    %s151 = sor.u32 %s149, %s150
    %p152 = scmp.eq.s32.totalorder %s151, 0
    %s154 = sadd.s32 %s153, 1
    %s155 = scalar_select %p152, %s153, %s154
    %p158 = pneg %p152
    %p159 = scmp.eq.s32.totalorder %s10, 1
    %p160 = por %p158, %p159
    %p161 = scmp.ne.s32.totalorder %s153, %s156
    %p162 = scmp.eq.s32.totalorder %s10, 0
    %p163 = por %p161, %p162
    %p164 = scmp.ne.s32.totalorder %s153, %s156
    %p165 = scmp.eq.s32.totalorder %s15, 1
    %p166 = por %p164, %p165
    %p167 = scmp.ne.s32.totalorder %s156, %s157
    %p168 = scmp.eq.s32.totalorder %s15, 0
    %p169 = por %p167, %p168
    %p170 = scmp.ne.s32.totalorder %s156, %s157
    %p171 = scmp.eq.s32.totalorder %s16, 1
    %p172 = por %p170, %p171
    %p174 = scmp.ne.s32.totalorder %s157, %s173
    %p175 = scmp.eq.s32.totalorder %s16, 0
    %p176 = por %p174, %p175
    %p177 = scmp.le.s32.totalorder 1, %s10
    %p178 = scmp.lt.s32.totalorder %s10, 3
    %p179 = pnand %p177, %p178
    %p180 = pneg %p179
    // Predicated region
    $region9: #{bert_self_attention.3} parent=5 // pred_check
      _
    $region10: #{bert_self_attention.3} parent=5 // pred_check_branch
      %182 = sbr.rel (%p179) target = $region12
    $region11: #{bert_self_attention.3} parent=5 // pred_region
      %s183 = ssub.s32 %s10, 1
    $region12: #{bert_self_attention.3} parent=5 // pred_fallthru
      _
    %p184 = scmp.lt.s32.totalorder %s10, 2
    // Predicated region
    $region13: #{bert_self_attention.3} parent=5 // pred_check
      %p185 = pneg %p184
    $region14: #{bert_self_attention.3} parent=5 // pred_check_branch
      %187 = sbr.rel (%p185) target = $region16
    $region15: #{bert_self_attention.3} parent=5 // pred_region
      // Predicated region
      $region17: #{bert_self_attention.3} parent=15 // pred_check
        %p188 = pneg %p51
      $region18: #{bert_self_attention.3} parent=15 // pred_check_branch
        %190 = sbr.rel (%p188) target = $region20
      $region19: #{bert_self_attention.3} parent=15 // pred_region
        %p191 = scmp.lt.s32.totalorder %s17, 1
        %s192 = scalar_select %p191, %s17, 1
        %p193 = scmp.lt.s32.totalorder %s18, 0
        %s194 = scalar_select %p193, %s18, 0
        %s195 = smul.addr %s192, 4
        %s196 = sadd.s32 %s194, %s195
        %s197 = smul.addr %s196, 4
        %s198 = scalar_lea.vmem %s0, %s197
      $region20: #{bert_self_attention.3} parent=15 // pred_fallthru
        _
      // Predicated region
      $region21: #{bert_self_attention.3} parent=15 // pred_check
        %p199 = pneg %p79
      $region22: #{bert_self_attention.3} parent=15 // pred_check_branch
        %201 = sbr.rel (%p199) target = $region24
      $region23: #{bert_self_attention.3} parent=15 // pred_region
        %p202 = scmp.lt.s32.totalorder %s17, 1
        %s203 = scalar_select %p202, %s17, 1
        %p204 = scmp.lt.s32.totalorder %s19, 0
        %s205 = scalar_select %p204, %s19, 0
        %s206 = smul.addr %s203, 4
        %s207 = sadd.s32 %s205, %s206
        %s208 = smul.addr %s207, 4
        %s209 = scalar_lea.vmem %s1, %s208
      $region24: #{bert_self_attention.3} parent=15 // pred_fallthru
        _
      // Predicated region
      $region25: #{bert_self_attention.3} parent=15 // pred_check
        %p210 = pneg %p107
      $region26: #{bert_self_attention.3} parent=15 // pred_check_branch
        %212 = sbr.rel (%p210) target = $region28
      $region27: #{bert_self_attention.3} parent=15 // pred_region
        %p213 = scmp.lt.s32.totalorder %s17, 1
        %s214 = scalar_select %p213, %s17, 1
        %p215 = scmp.lt.s32.totalorder %s19, 0
        %s216 = scalar_select %p215, %s19, 0
        %s217 = smul.addr %s214, 4
        %s218 = sadd.s32 %s216, %s217
        %s219 = smul.addr %s218, 4
        %s220 = scalar_lea.vmem %s2, %s219
      $region28: #{bert_self_attention.3} parent=15 // pred_fallthru
        _
      // Predicated region
      $region29: #{bert_self_attention.3} parent=15 // pred_check
        %p221 = pneg %p135
      $region30: #{bert_self_attention.3} parent=15 // pred_check_branch
        %223 = sbr.rel (%p221) target = $region32
      $region31: #{bert_self_attention.3} parent=15 // pred_region
        %p224 = scmp.lt.s32.totalorder %s17, 1
        %s225 = scalar_select %p224, %s17, 1
        %p226 = scmp.lt.s32.totalorder %s19, 0
        %s227 = scalar_select %p226, %s19, 0
        %s228 = sadd.s32 %s227, %s225
        %s229 = scalar_lea.vmem %s3, %s228
      $region32: #{bert_self_attention.3} parent=15 // pred_fallthru
        _
    $region16: #{bert_self_attention.3} parent=5 // pred_fallthru
      _
    %p230 = scmp.le.s32.totalorder 1, %s10
    %p231 = scmp.lt.s32.totalorder %s10, 3
    %p232 = pnand %p230, %p231
    %p233 = pneg %p232
    // Predicated region
    $region33: #{bert_self_attention.3} parent=5 // pred_check
      _
    $region34: #{bert_self_attention.3} parent=5 // pred_check_branch
      %235 = sbr.rel (%p232) target = $region36
    $region35: #{bert_self_attention.3} parent=5 // pred_region
      %s236 = ssub.s32 %s10, 1
      %p237 = scmp.lt.s32.totalorder %s20, 1
      %s238 = scalar_select %p237, %s20, 1
      %p239 = scmp.lt.s32.totalorder %s21, 0
      %s240 = scalar_select %p239, %s21, 0
      %s241 = smul.addr %s238, 4
      %s242 = sadd.s32 %s240, %s241
      %s243 = smul.addr %s242, 4
      %s244 = scalar_lea.vmem %s0, %s243
      %p245 = pneg %p57
      %p246 = pneg %p54
      %p247 = scmp.lt.s32.totalorder %s20, 1
      %s248 = scalar_select %p247, %s20, 1
      %p249 = scmp.lt.s32.totalorder %s22, 0
      %s250 = scalar_select %p249, %s22, 0
      %s251 = smul.addr %s248, 4
      %s252 = sadd.s32 %s250, %s251
      %s253 = smul.addr %s252, 4
      %s254 = scalar_lea.vmem %s1, %s253
      %p255 = pneg %p85
      %p256 = pneg %p82
      %p257 = scmp.lt.s32.totalorder %s20, 1
      %s258 = scalar_select %p257, %s20, 1
      %p259 = scmp.lt.s32.totalorder %s22, 0
      %s260 = scalar_select %p259, %s22, 0
      %s261 = smul.addr %s258, 4
      %s262 = sadd.s32 %s260, %s261
      %s263 = smul.addr %s262, 4
      %s264 = scalar_lea.vmem %s2, %s263
      %p265 = pneg %p113
      %p266 = pneg %p110
      %p267 = scmp.lt.s32.totalorder %s20, 1
      %s268 = scalar_select %p267, %s20, 1
      %p269 = scmp.lt.s32.totalorder %s22, 0
      %s270 = scalar_select %p269, %s22, 0
      %s271 = sadd.s32 %s270, %s268
      %s272 = scalar_lea.vmem %s3, %s271
      %p273 = pneg %p141
      %p274 = pneg %p138
      %p275 = pneg %p169
      %p276 = pneg %p166
      %s277 = smul.u32 8, %s21
      %p278 = scmp.lt.s32.totalorder %s20, 1
      %s279 = scalar_select %p278, %s20, 1
      %p280 = scmp.lt.s32.totalorder %s277, 7
      %s281 = scalar_select %p280, %s277, 7
      %s282 = smul.addr %s279, 8
      %s283 = sadd.s32 %s281, %s282
      %s284 = smul.addr %s283, 4
      %s285 = scalar_lea.vmem %s4, %s284
      %p286 = scmp.lt.s32.totalorder %s20, 1
      %s287 = scalar_select %p286, %s20, 1
      %p288 = scmp.lt.s32.totalorder %s21, 0
      %s289 = scalar_select %p288, %s21, 0
      %s290 = smul.addr %s287, 4
      %s291 = sadd.s32 %s289, %s290
      %s292 = smul.addr %s291, 4
      %s293 = scalar_lea.vmem %s0, %s292
      %p294 = scmp.lt.s32.totalorder %s20, 1
      %s295 = scalar_select %p294, %s20, 1
      %p296 = scmp.lt.s32.totalorder %s22, 0
      %s297 = scalar_select %p296, %s22, 0
      %s298 = smul.addr %s295, 4
      %s299 = sadd.s32 %s297, %s298
      %s300 = smul.addr %s299, 4
      %s301 = scalar_lea.vmem %s1, %s300
      %p302 = scmp.lt.s32.totalorder %s20, 1
      %s303 = scalar_select %p302, %s20, 1
      %p304 = scmp.lt.s32.totalorder %s22, 0
      %s305 = scalar_select %p304, %s22, 0
      %s306 = smul.addr %s303, 4
      %s307 = sadd.s32 %s305, %s306
      %s308 = smul.addr %s307, 4
      %s309 = scalar_lea.vmem %s2, %s308
      %p310 = scmp.lt.s32.totalorder %s20, 1
      %s311 = scalar_select %p310, %s20, 1
      %p312 = scmp.lt.s32.totalorder %s22, 0
      %s313 = scalar_select %p312, %s22, 0
      %s314 = sadd.s32 %s313, %s311
      %s315 = scalar_lea.vmem %s3, %s314
      %s316 = smul.u32 8, %s21
      %p317 = scmp.lt.s32.totalorder %s20, 1
      %s318 = scalar_select %p317, %s20, 1
      %p319 = scmp.lt.s32.totalorder %s316, 7
      %s320 = scalar_select %p319, %s316, 7
      %s321 = smul.addr %s318, 8
      %s322 = sadd.s32 %s320, %s321
      %s323 = smul.addr %s322, 4
      %s324 = scalar_lea.vmem %s4, %s323
      %s325 = smul.u32 8, %s21
      %p327 = scmp.eq.s32.totalorder %s22, 0
      // Predicated region
      $region37: #{bert_self_attention.3} parent=35 // pred_check
        %p328 = pneg %p327
      $region38: #{bert_self_attention.3} parent=35 // pred_check_branch
        %330 = sbr.rel (%p328) target = $region40
      $region39: #{bert_self_attention.3} parent=35 // pred_region
        %vm331 = vcmask 7168
        %332 = vst.msk [vmem:[#allocation2] sm:$0xff] %vm331, -1e+30
        %333 = vst.msk [vmem:[#allocation2 + $0x8] sm:$0xff] %vm331, -1e+30
        %334 = vst.msk [vmem:[#allocation2 + $0x10] sm:$0xff] %vm331, -1e+30
        %335 = vst.msk [vmem:[#allocation2 + $0x18] sm:$0xff] %vm331, -1e+30
        %336 = vst.msk [vmem:[#allocation3] sm:$0xff] %vm331, 0.0
        %337 = vst.msk [vmem:[#allocation3 + $0x8] sm:$0xff] %vm331, 0.0
        %338 = vst.msk [vmem:[#allocation3 + $0x10] sm:$0xff] %vm331, 0.0
        %339 = vst.msk [vmem:[#allocation3 + $0x18] sm:$0xff] %vm331, 0.0
        %vm340 = vcmask 64512
        %341 = vst.msk [vmem:[#allocation4] sm:$0xff] %vm340, 0.0
        %342 = vst.msk [vmem:[#allocation4 + $0x8] sm:$0xff] %vm340, 0.0
        %343 = vst.msk [vmem:[#allocation4 + $0x10] sm:$0xff] %vm340, 0.0
        %344 = vst.msk [vmem:[#allocation4 + $0x18] sm:$0xff] %vm340, 0.0
      $region40: #{bert_self_attention.3} parent=35 // pred_fallthru
        _
      %v345 = vld [vmem:[%s315] sm:$0x1]
      %v346 = vld [vmem:[%s293] sm:$0xf]
      %v347 = vld [vmem:[%s301] sm:$0xf]
      %v348 = vld [vmem:[%s309] sm:$0xf]
      %v350 = vlaneseq
      %v351 = vshrl.u32 %v350, 7
      %v352 = vsub.s32 0, %v351
      %v353 = vrot.slane %v345, %v352
      %vm355 = vcmask 64512
      %v357 = vsel %vm355, %v346, 0
      %v360 = vsel %vm355, %v347, 0
      %362 = vmatprep.subr.bf16.mxu0 0
      %363 = vmatpush1.bf16.xpose.msra.mxu0 %v360
      %364 = vmatprep.subr.bf16.mxu0 0
      %365 = vmatpush1.bf16.xpose.msra.mxu0 0
      %366 = vmatprep.subr.bf16.mxu0 0
      %367 = vmatpush1.bf16.xpose.msra.mxu0 0
      %368 = vmatprep.subr.bf16.mxu0 0
      %369 = vmatpush1.bf16.xpose.msra.mxu0 0
      %370 = vmatprep.subr.bf16.mxu0 0
      %371 = vmatpush1.bf16.xpose.msra.mxu0 0
      %372 = vmatprep.subr.bf16.mxu0 0
      %373 = vmatpush1.bf16.xpose.msra.mxu0 0
      %374 = vmatprep.subr.bf16.mxu0 0
      %375 = vmatpush1.bf16.xpose.msra.mxu0 0
      %376 = vmatprep.subr.bf16.mxu0 0
      %377 = vmatpush1.bf16.xpose.msra.mxu0 0
      %378 = vmatprep.subr.bf16.mxu0 0
      %379 = vmatpush1.bf16.xpose.msra.mxu0 0
      %380 = vmatprep.subr.bf16.mxu0 0
      %381 = vmatpush1.bf16.xpose.msra.mxu0 0
      %382 = vmatprep.subr.bf16.mxu0 0
      %383 = vmatpush1.bf16.xpose.msra.mxu0 0
      %384 = vmatprep.subr.bf16.mxu0 0
      %385 = vmatpush1.bf16.xpose.msra.mxu0 0
      %386 = vmatprep.subr.bf16.mxu0 0
      %387 = vmatpush1.bf16.xpose.msra.mxu0 0
      %388 = vmatprep.subr.bf16.mxu0 0
      %389 = vmatpush1.bf16.xpose.msra.mxu0 0
      %390 = vmatprep.subr.bf16.mxu0 0
      %391 = vmatpush1.bf16.xpose.msra.mxu0 0
      %392 = vmatprep.subr.bf16.mxu0 0
      %393 = vmatpush1.bf16.xpose.msra.mxu0 0
      %394 = vmatprep.mubr.bf16.mxu0 0
      %395 = vmatmul.mubr.bf16.gmra.mrb[0].mxu0 %v357
      %v396 = vpop.f32.mrb[0].mxu0
      %v397 = vadd.f32 %v353, %v396
      %v398 = vpop.f32.mrb[0].mxu0
      %v399 = vpop.f32.mrb[0].mxu0
      %v400 = vpop.f32.mrb[0].mxu0
      %401 = vdwg.mxu0
      %v402 = vld [vmem:[#allocation2] sm:$0xff]
      %v403 = vsel %vm355, %v397, -inf
      %404 = vmax.xlane.f32.xlu0 %v403
      %v405 = vpop.xlane.xlu0 %404
      %v406 = vmax.f32 %v402, %v405
      %v407 = vsub.f32 %v402, %v406
      %v408 = vmul.f32 %v407, 1.442695
      %v409 = vpow.pop %v408
      %411 = vset.pattern.permute.xlu0 0
      %412 = vperm.xlu0 %411, %v406
      %v413 = vpop.permute.xlu0 %412
      %v415 = vsub.f32 %v397, %v413
      %v416 = vmul.f32 %v415, 1.442695
      %v417 = vpow.pop %v416
      %v418 = vld [vmem:[#allocation3] sm:$0xff]
      %v419 = vmul.f32 %v409, %v418
      %v420 = vsel %vm355, %v417, 0.0
      %421 = vadd.xlane.f32.xlu0 %v420
      %v422 = vpop.xlane.xlu0 %421
      %v423 = vadd.f32 %v419, %v422
      %vm424 = vcmask 7168
      %425 = vst.msk [vmem:[#allocation3] sm:$0xff] %vm424, %v423
      %v426 = vld [vmem:[#allocation4] sm:$0xff]
      %428 = vset.pattern.permute.xlu0 0
      %429 = vperm.xlu0 %428, %v409
      %v430 = vpop.permute.xlu0 %429
      %v432 = vmul.f32 %v430, %v426
      %v433 = vpack.c.bf16 %v417, %v417
      %v435 = vsel %vm355, %v433, 0
      %vm437 = vcmask 1043456
      %v439 = vsel %vm437, %v348, 0
      %441 = vmatprep.subr.bf16.mxu0 0
      %442 = vmatpush1.bf16.msra.mxu0 %v439
      %443 = vmatprep.subr.bf16.mxu0 0
      %444 = vmatpush1.bf16.msra.mxu0 0
      %445 = vmatprep.subr.bf16.mxu0 0
      %446 = vmatpush1.bf16.msra.mxu0 0
      %447 = vmatprep.subr.bf16.mxu0 0
      %448 = vmatpush1.bf16.msra.mxu0 0
      %449 = vmatprep.subr.bf16.mxu0 0
      %450 = vmatpush1.bf16.msra.mxu0 0
      %451 = vmatprep.subr.bf16.mxu0 0
      %452 = vmatpush1.bf16.msra.mxu0 0
      %453 = vmatprep.subr.bf16.mxu0 0
      %454 = vmatpush1.bf16.msra.mxu0 0
      %455 = vmatprep.subr.bf16.mxu0 0
      %456 = vmatpush1.bf16.msra.mxu0 0
      %457 = vmatprep.subr.bf16.mxu0 0
      %458 = vmatpush1.bf16.msra.mxu0 0
      %459 = vmatprep.subr.bf16.mxu0 0
      %460 = vmatpush1.bf16.msra.mxu0 0
      %461 = vmatprep.subr.bf16.mxu0 0
      %462 = vmatpush1.bf16.msra.mxu0 0
      %463 = vmatprep.subr.bf16.mxu0 0
      %464 = vmatpush1.bf16.msra.mxu0 0
      %465 = vmatprep.subr.bf16.mxu0 0
      %466 = vmatpush1.bf16.msra.mxu0 0
      %467 = vmatprep.subr.bf16.mxu0 0
      %468 = vmatpush1.bf16.msra.mxu0 0
      %469 = vmatprep.subr.bf16.mxu0 0
      %470 = vmatpush1.bf16.msra.mxu0 0
      %471 = vmatprep.subr.bf16.mxu0 0
      %472 = vmatpush1.bf16.msra.mxu0 0
      %473 = vmatprep.mubr.bf16.mxu0 0
      %474 = vmatmul.mubr.bf16.gmra.mrb[0].mxu0 %v435
      %v475 = vpop.f32.mrb[0].mxu0
      %v476 = vadd.f32 0.0, %v475
      %v477 = vpop.f32.mrb[0].mxu0
      %v478 = vpop.f32.mrb[0].mxu0
      %v479 = vpop.f32.mrb[0].mxu0
      %480 = vdwg.mxu0
      %v481 = vadd.f32 %v432, %v476
      %482 = vst.msk [vmem:[#allocation4] sm:$0xff] %vm355, %v481
      %483 = vst.msk [vmem:[#allocation2] sm:$0xff] %vm424, %v406
      %s484 = scalar_lea.vmem %s293, 4
      %v485 = vld [vmem:[%s484] sm:$0xf]
      %s486 = scalar_lea.vmem %s301, 4
      %v487 = vld [vmem:[%s486] sm:$0xf]
      %s488 = scalar_lea.vmem %s309, 4
      %v489 = vld [vmem:[%s488] sm:$0xf]
      %v491 = vsel %vm355, %v485, 0
      %v494 = vsel %vm355, %v487, 0
      %496 = vmatprep.subr.bf16.mxu0 0
      %497 = vmatpush1.bf16.xpose.msra.mxu0 %v494
      %498 = vmatprep.subr.bf16.mxu0 0
      %499 = vmatpush1.bf16.xpose.msra.mxu0 0
      %500 = vmatprep.subr.bf16.mxu0 0
      %501 = vmatpush1.bf16.xpose.msra.mxu0 0
      %502 = vmatprep.subr.bf16.mxu0 0
      %503 = vmatpush1.bf16.xpose.msra.mxu0 0
      %504 = vmatprep.subr.bf16.mxu0 0
      %505 = vmatpush1.bf16.xpose.msra.mxu0 0
      %506 = vmatprep.subr.bf16.mxu0 0
      %507 = vmatpush1.bf16.xpose.msra.mxu0 0
      %508 = vmatprep.subr.bf16.mxu0 0
      %509 = vmatpush1.bf16.xpose.msra.mxu0 0
      %510 = vmatprep.subr.bf16.mxu0 0
      %511 = vmatpush1.bf16.xpose.msra.mxu0 0
      %512 = vmatprep.subr.bf16.mxu0 0
      %513 = vmatpush1.bf16.xpose.msra.mxu0 0
      %514 = vmatprep.subr.bf16.mxu0 0
      %515 = vmatpush1.bf16.xpose.msra.mxu0 0
      %516 = vmatprep.subr.bf16.mxu0 0
      %517 = vmatpush1.bf16.xpose.msra.mxu0 0
      %518 = vmatprep.subr.bf16.mxu0 0
      %519 = vmatpush1.bf16.xpose.msra.mxu0 0
      %520 = vmatprep.subr.bf16.mxu0 0
      %521 = vmatpush1.bf16.xpose.msra.mxu0 0
      %522 = vmatprep.subr.bf16.mxu0 0
      %523 = vmatpush1.bf16.xpose.msra.mxu0 0
      %524 = vmatprep.subr.bf16.mxu0 0
      %525 = vmatpush1.bf16.xpose.msra.mxu0 0
      %526 = vmatprep.subr.bf16.mxu0 0
      %527 = vmatpush1.bf16.xpose.msra.mxu0 0
      %528 = vmatprep.mubr.bf16.mxu0 0
      %529 = vmatmul.mubr.bf16.gmra.mrb[0].mxu0 %v491
      %v530 = vpop.f32.mrb[0].mxu0
      %v531 = vadd.f32 %v353, %v530
      %v532 = vpop.f32.mrb[0].mxu0
      %v533 = vpop.f32.mrb[0].mxu0
      %v534 = vpop.f32.mrb[0].mxu0
      %535 = vdwg.mxu0
      %s536 = scalar_lea.vmem [#allocation2], 8
      %v537 = vld [vmem:[%s536] sm:$0xff]
      %v538 = vsel %vm355, %v531, -inf
      %539 = vmax.xlane.f32.xlu0 %v538
      %v540 = vpop.xlane.xlu0 %539
      %v541 = vmax.f32 %v537, %v540
      %v542 = vsub.f32 %v537, %v541
      %v543 = vmul.f32 %v542, 1.442695
      %v544 = vpow.pop %v543
      %546 = vset.pattern.permute.xlu0 0
      %547 = vperm.xlu0 %546, %v541
      %v548 = vpop.permute.xlu0 %547
      %v550 = vsub.f32 %v531, %v548
      %v551 = vmul.f32 %v550, 1.442695
      %v552 = vpow.pop %v551
      %s553 = scalar_lea.vmem [#allocation3], 8
      %v554 = vld [vmem:[%s553] sm:$0xff]
      %v555 = vmul.f32 %v544, %v554
      %v556 = vsel %vm355, %v552, 0.0
      %557 = vadd.xlane.f32.xlu0 %v556
      %v558 = vpop.xlane.xlu0 %557
      %v559 = vadd.f32 %v555, %v558
      %560 = vst.msk [vmem:[%s553] sm:$0xff] %vm424, %v559
      %s561 = scalar_lea.vmem [#allocation4], 8
      %v562 = vld [vmem:[%s561] sm:$0xff]
      %564 = vset.pattern.permute.xlu0 0
      %565 = vperm.xlu0 %564, %v544
      %v566 = vpop.permute.xlu0 %565
      %v568 = vmul.f32 %v566, %v562
      %v569 = vpack.c.bf16 %v552, %v552
      %v571 = vsel %vm355, %v569, 0
      %v574 = vsel %vm437, %v489, 0
      %576 = vmatprep.subr.bf16.mxu0 0
      %577 = vmatpush1.bf16.msra.mxu0 %v574
      %578 = vmatprep.subr.bf16.mxu0 0
      %579 = vmatpush1.bf16.msra.mxu0 0
      %580 = vmatprep.subr.bf16.mxu0 0
      %581 = vmatpush1.bf16.msra.mxu0 0
      %582 = vmatprep.subr.bf16.mxu0 0
      %583 = vmatpush1.bf16.msra.mxu0 0
      %584 = vmatprep.subr.bf16.mxu0 0
      %585 = vmatpush1.bf16.msra.mxu0 0
      %586 = vmatprep.subr.bf16.mxu0 0
      %587 = vmatpush1.bf16.msra.mxu0 0
      %588 = vmatprep.subr.bf16.mxu0 0
      %589 = vmatpush1.bf16.msra.mxu0 0
      %590 = vmatprep.subr.bf16.mxu0 0
      %591 = vmatpush1.bf16.msra.mxu0 0
      %592 = vmatprep.subr.bf16.mxu0 0
      %593 = vmatpush1.bf16.msra.mxu0 0
      %594 = vmatprep.subr.bf16.mxu0 0
      %595 = vmatpush1.bf16.msra.mxu0 0
      %596 = vmatprep.subr.bf16.mxu0 0
      %597 = vmatpush1.bf16.msra.mxu0 0
      %598 = vmatprep.subr.bf16.mxu0 0
      %599 = vmatpush1.bf16.msra.mxu0 0
      %600 = vmatprep.subr.bf16.mxu0 0
      %601 = vmatpush1.bf16.msra.mxu0 0
      %602 = vmatprep.subr.bf16.mxu0 0
      %603 = vmatpush1.bf16.msra.mxu0 0
      %604 = vmatprep.subr.bf16.mxu0 0
      %605 = vmatpush1.bf16.msra.mxu0 0
      %606 = vmatprep.subr.bf16.mxu0 0
      %607 = vmatpush1.bf16.msra.mxu0 0
      %608 = vmatprep.mubr.bf16.mxu0 0
      %609 = vmatmul.mubr.bf16.gmra.mrb[0].mxu0 %v571
      %v610 = vpop.f32.mrb[0].mxu0
      %v611 = vadd.f32 0.0, %v610
      %v612 = vpop.f32.mrb[0].mxu0
      %v613 = vpop.f32.mrb[0].mxu0
      %v614 = vpop.f32.mrb[0].mxu0
      %615 = vdwg.mxu0
      %v616 = vadd.f32 %v568, %v611
      %617 = vst.msk [vmem:[%s561] sm:$0xff] %vm355, %v616
      %618 = vst.msk [vmem:[%s536] sm:$0xff] %vm424, %v541
      %s619 = scalar_lea.vmem %s293, 8
      %v620 = vld [vmem:[%s619] sm:$0xf]
      %s621 = scalar_lea.vmem %s301, 8
      %v622 = vld [vmem:[%s621] sm:$0xf]
      %s623 = scalar_lea.vmem %s309, 8
      %v624 = vld [vmem:[%s623] sm:$0xf]
      %v626 = vsel %vm355, %v620, 0
      %v629 = vsel %vm355, %v622, 0
      %631 = vmatprep.subr.bf16.mxu0 0
      %632 = vmatpush1.bf16.xpose.msra.mxu0 %v629
      %633 = vmatprep.subr.bf16.mxu0 0
      %634 = vmatpush1.bf16.xpose.msra.mxu0 0
      %635 = vmatprep.subr.bf16.mxu0 0
      %636 = vmatpush1.bf16.xpose.msra.mxu0 0
      %637 = vmatprep.subr.bf16.mxu0 0
      %638 = vmatpush1.bf16.xpose.msra.mxu0 0
      %639 = vmatprep.subr.bf16.mxu0 0
      %640 = vmatpush1.bf16.xpose.msra.mxu0 0
      %641 = vmatprep.subr.bf16.mxu0 0
      %642 = vmatpush1.bf16.xpose.msra.mxu0 0
      %643 = vmatprep.subr.bf16.mxu0 0
      %644 = vmatpush1.bf16.xpose.msra.mxu0 0
      %645 = vmatprep.subr.bf16.mxu0 0
      %646 = vmatpush1.bf16.xpose.msra.mxu0 0
      %647 = vmatprep.subr.bf16.mxu0 0
      %648 = vmatpush1.bf16.xpose.msra.mxu0 0
      %649 = vmatprep.subr.bf16.mxu0 0
      %650 = vmatpush1.bf16.xpose.msra.mxu0 0
      %651 = vmatprep.subr.bf16.mxu0 0
      %652 = vmatpush1.bf16.xpose.msra.mxu0 0
      %653 = vmatprep.subr.bf16.mxu0 0
      %654 = vmatpush1.bf16.xpose.msra.mxu0 0
      %655 = vmatprep.subr.bf16.mxu0 0
      %656 = vmatpush1.bf16.xpose.msra.mxu0 0
      %657 = vmatprep.subr.bf16.mxu0 0
      %658 = vmatpush1.bf16.xpose.msra.mxu0 0
      %659 = vmatprep.subr.bf16.mxu0 0
      %660 = vmatpush1.bf16.xpose.msra.mxu0 0
      %661 = vmatprep.subr.bf16.mxu0 0
      %662 = vmatpush1.bf16.xpose.msra.mxu0 0
      %663 = vmatprep.mubr.bf16.mxu0 0
      %664 = vmatmul.mubr.bf16.gmra.mrb[0].mxu0 %v626
      %v665 = vpop.f32.mrb[0].mxu0
      %v666 = vadd.f32 %v353, %v665
      %v667 = vpop.f32.mrb[0].mxu0
      %v668 = vpop.f32.mrb[0].mxu0
      %v669 = vpop.f32.mrb[0].mxu0
      %670 = vdwg.mxu0
      %s671 = scalar_lea.vmem [#allocation2], 16
      %v672 = vld [vmem:[%s671] sm:$0xff]
      %v673 = vsel %vm355, %v666, -inf
      %674 = vmax.xlane.f32.xlu0 %v673
      %v675 = vpop.xlane.xlu0 %674
      %v676 = vmax.f32 %v672, %v675
      %v677 = vsub.f32 %v672, %v676
      %v678 = vmul.f32 %v677, 1.442695
      %v679 = vpow.pop %v678
      %681 = vset.pattern.permute.xlu0 0
      %682 = vperm.xlu0 %681, %v676
      %v683 = vpop.permute.xlu0 %682
      %v685 = vsub.f32 %v666, %v683
      %v686 = vmul.f32 %v685, 1.442695
      %v687 = vpow.pop %v686
      %s688 = scalar_lea.vmem [#allocation3], 16
      %v689 = vld [vmem:[%s688] sm:$0xff]
      %v690 = vmul.f32 %v679, %v689
      %v691 = vsel %vm355, %v687, 0.0
      %692 = vadd.xlane.f32.xlu0 %v691
      %v693 = vpop.xlane.xlu0 %692
      %v694 = vadd.f32 %v690, %v693
      %695 = vst.msk [vmem:[%s688] sm:$0xff] %vm424, %v694
      %s696 = scalar_lea.vmem [#allocation4], 16
      %v697 = vld [vmem:[%s696] sm:$0xff]
      %699 = vset.pattern.permute.xlu0 0
      %700 = vperm.xlu0 %699, %v679
      %v701 = vpop.permute.xlu0 %700
      %v703 = vmul.f32 %v701, %v697
      %v704 = vpack.c.bf16 %v687, %v687
      %v706 = vsel %vm355, %v704, 0
      %v709 = vsel %vm437, %v624, 0
      %711 = vmatprep.subr.bf16.mxu0 0
      %712 = vmatpush1.bf16.msra.mxu0 %v709
      %713 = vmatprep.subr.bf16.mxu0 0
      %714 = vmatpush1.bf16.msra.mxu0 0
      %715 = vmatprep.subr.bf16.mxu0 0
      %716 = vmatpush1.bf16.msra.mxu0 0
      %717 = vmatprep.subr.bf16.mxu0 0
      %718 = vmatpush1.bf16.msra.mxu0 0
      %719 = vmatprep.subr.bf16.mxu0 0
      %720 = vmatpush1.bf16.msra.mxu0 0
      %721 = vmatprep.subr.bf16.mxu0 0
      %722 = vmatpush1.bf16.msra.mxu0 0
      %723 = vmatprep.subr.bf16.mxu0 0
      %724 = vmatpush1.bf16.msra.mxu0 0
      %725 = vmatprep.subr.bf16.mxu0 0
      %726 = vmatpush1.bf16.msra.mxu0 0
      %727 = vmatprep.subr.bf16.mxu0 0
      %728 = vmatpush1.bf16.msra.mxu0 0
      %729 = vmatprep.subr.bf16.mxu0 0
      %730 = vmatpush1.bf16.msra.mxu0 0
      %731 = vmatprep.subr.bf16.mxu0 0
      %732 = vmatpush1.bf16.msra.mxu0 0
      %733 = vmatprep.subr.bf16.mxu0 0
      %734 = vmatpush1.bf16.msra.mxu0 0
      %735 = vmatprep.subr.bf16.mxu0 0
      %736 = vmatpush1.bf16.msra.mxu0 0
      %737 = vmatprep.subr.bf16.mxu0 0
      %738 = vmatpush1.bf16.msra.mxu0 0
      %739 = vmatprep.subr.bf16.mxu0 0
      %740 = vmatpush1.bf16.msra.mxu0 0
      %741 = vmatprep.subr.bf16.mxu0 0
      %742 = vmatpush1.bf16.msra.mxu0 0
      %743 = vmatprep.mubr.bf16.mxu0 0
      %744 = vmatmul.mubr.bf16.gmra.mrb[0].mxu0 %v706
      %v745 = vpop.f32.mrb[0].mxu0
      %v746 = vadd.f32 0.0, %v745
      %v747 = vpop.f32.mrb[0].mxu0
      %v748 = vpop.f32.mrb[0].mxu0
      %v749 = vpop.f32.mrb[0].mxu0
      %750 = vdwg.mxu0
      %v751 = vadd.f32 %v703, %v746
      %752 = vst.msk [vmem:[%s696] sm:$0xff] %vm355, %v751
      %753 = vst.msk [vmem:[%s671] sm:$0xff] %vm424, %v676
      %s754 = scalar_lea.vmem %s293, 12
      %v755 = vld [vmem:[%s754] sm:$0xf]
      %s756 = scalar_lea.vmem %s301, 12
      %v757 = vld [vmem:[%s756] sm:$0xf]
      %s758 = scalar_lea.vmem %s309, 12
      %v759 = vld [vmem:[%s758] sm:$0xf]
      %v761 = vsel %vm355, %v755, 0
      %v764 = vsel %vm355, %v757, 0
      %766 = vmatprep.subr.bf16.mxu0 0
      %767 = vmatpush1.bf16.xpose.msra.mxu0 %v764
      %768 = vmatprep.subr.bf16.mxu0 0
      %769 = vmatpush1.bf16.xpose.msra.mxu0 0
      %770 = vmatprep.subr.bf16.mxu0 0
      %771 = vmatpush1.bf16.xpose.msra.mxu0 0
      %772 = vmatprep.subr.bf16.mxu0 0
      %773 = vmatpush1.bf16.xpose.msra.mxu0 0
      %774 = vmatprep.subr.bf16.mxu0 0
      %775 = vmatpush1.bf16.xpose.msra.mxu0 0
      %776 = vmatprep.subr.bf16.mxu0 0
      %777 = vmatpush1.bf16.xpose.msra.mxu0 0
      %778 = vmatprep.subr.bf16.mxu0 0
      %779 = vmatpush1.bf16.xpose.msra.mxu0 0
      %780 = vmatprep.subr.bf16.mxu0 0
      %781 = vmatpush1.bf16.xpose.msra.mxu0 0
      %782 = vmatprep.subr.bf16.mxu0 0
      %783 = vmatpush1.bf16.xpose.msra.mxu0 0
      %784 = vmatprep.subr.bf16.mxu0 0
      %785 = vmatpush1.bf16.xpose.msra.mxu0 0
      %786 = vmatprep.subr.bf16.mxu0 0
      %787 = vmatpush1.bf16.xpose.msra.mxu0 0
      %788 = vmatprep.subr.bf16.mxu0 0
      %789 = vmatpush1.bf16.xpose.msra.mxu0 0
      %790 = vmatprep.subr.bf16.mxu0 0
      %791 = vmatpush1.bf16.xpose.msra.mxu0 0
      %792 = vmatprep.subr.bf16.mxu0 0
      %793 = vmatpush1.bf16.xpose.msra.mxu0 0
      %794 = vmatprep.subr.bf16.mxu0 0
      %795 = vmatpush1.bf16.xpose.msra.mxu0 0
      %796 = vmatprep.subr.bf16.mxu0 0
      %797 = vmatpush1.bf16.xpose.msra.mxu0 0
      %798 = vmatprep.mubr.bf16.mxu0 0
      %799 = vmatmul.mubr.bf16.gmra.mrb[0].mxu0 %v761
      %v800 = vpop.f32.mrb[0].mxu0
      %v801 = vadd.f32 %v353, %v800
      %v802 = vpop.f32.mrb[0].mxu0
      %v803 = vpop.f32.mrb[0].mxu0
      %v804 = vpop.f32.mrb[0].mxu0
      %805 = vdwg.mxu0
      %s806 = scalar_lea.vmem [#allocation2], 24
      %v807 = vld [vmem:[%s806] sm:$0xff]
      %v808 = vsel %vm355, %v801, -inf
      %809 = vmax.xlane.f32.xlu0 %v808
      %v810 = vpop.xlane.xlu0 %809
      %v811 = vmax.f32 %v807, %v810
      %v812 = vsub.f32 %v807, %v811
      %v813 = vmul.f32 %v812, 1.442695
      %v814 = vpow.pop %v813
      %816 = vset.pattern.permute.xlu0 0
      %817 = vperm.xlu0 %816, %v811
      %v818 = vpop.permute.xlu0 %817
      %v820 = vsub.f32 %v801, %v818
      %v821 = vmul.f32 %v820, 1.442695
      %v822 = vpow.pop %v821
      %s823 = scalar_lea.vmem [#allocation3], 24
      %v824 = vld [vmem:[%s823] sm:$0xff]
      %v825 = vmul.f32 %v814, %v824
      %v826 = vsel %vm355, %v822, 0.0
      %827 = vadd.xlane.f32.xlu0 %v826
      %v828 = vpop.xlane.xlu0 %827
      %v829 = vadd.f32 %v825, %v828
      %830 = vst.msk [vmem:[%s823] sm:$0xff] %vm424, %v829
      %s831 = scalar_lea.vmem [#allocation4], 24
      %v832 = vld [vmem:[%s831] sm:$0xff]
      %834 = vset.pattern.permute.xlu0 0
      %835 = vperm.xlu0 %834, %v814
      %v836 = vpop.permute.xlu0 %835
      %v838 = vmul.f32 %v836, %v832
      %v839 = vpack.c.bf16 %v822, %v822
      %v841 = vsel %vm355, %v839, 0
      %v844 = vsel %vm437, %v759, 0
      %846 = vmatprep.subr.bf16.mxu0 0
      %847 = vmatpush1.bf16.msra.mxu0 %v844
      %848 = vmatprep.subr.bf16.mxu0 0
      %849 = vmatpush1.bf16.msra.mxu0 0
      %850 = vmatprep.subr.bf16.mxu0 0
      %851 = vmatpush1.bf16.msra.mxu0 0
      %852 = vmatprep.subr.bf16.mxu0 0
      %853 = vmatpush1.bf16.msra.mxu0 0
      %854 = vmatprep.subr.bf16.mxu0 0
      %855 = vmatpush1.bf16.msra.mxu0 0
      %856 = vmatprep.subr.bf16.mxu0 0
      %857 = vmatpush1.bf16.msra.mxu0 0
      %858 = vmatprep.subr.bf16.mxu0 0
      %859 = vmatpush1.bf16.msra.mxu0 0
      %860 = vmatprep.subr.bf16.mxu0 0
      %861 = vmatpush1.bf16.msra.mxu0 0
      %862 = vmatprep.subr.bf16.mxu0 0
      %863 = vmatpush1.bf16.msra.mxu0 0
      %864 = vmatprep.subr.bf16.mxu0 0
      %865 = vmatpush1.bf16.msra.mxu0 0
      %866 = vmatprep.subr.bf16.mxu0 0
      %867 = vmatpush1.bf16.msra.mxu0 0
      %868 = vmatprep.subr.bf16.mxu0 0
      %869 = vmatpush1.bf16.msra.mxu0 0
      %870 = vmatprep.subr.bf16.mxu0 0
      %871 = vmatpush1.bf16.msra.mxu0 0
      %872 = vmatprep.subr.bf16.mxu0 0
      %873 = vmatpush1.bf16.msra.mxu0 0
      %874 = vmatprep.subr.bf16.mxu0 0
      %875 = vmatpush1.bf16.msra.mxu0 0
      %876 = vmatprep.subr.bf16.mxu0 0
      %877 = vmatpush1.bf16.msra.mxu0 0
      %878 = vmatprep.mubr.bf16.mxu0 0
      %879 = vmatmul.mubr.bf16.gmra.mrb[0].mxu0 %v841
      %v880 = vpop.f32.mrb[0].mxu0
      %v881 = vadd.f32 0.0, %v880
      %v882 = vpop.f32.mrb[0].mxu0
      %v883 = vpop.f32.mrb[0].mxu0
      %v884 = vpop.f32.mrb[0].mxu0
      %885 = vdwg.mxu0
      %v886 = vadd.f32 %v838, %v881
      %887 = vst.msk [vmem:[%s831] sm:$0xff] %vm355, %v886
      %888 = vst.msk [vmem:[%s806] sm:$0xff] %vm424, %v811
      // Predicated region
      $region41: #{bert_self_attention.3} parent=35 // pred_check
        %p889 = pneg %p327
      $region42: #{bert_self_attention.3} parent=35 // pred_check_branch
        %891 = sbr.rel (%p889) target = $region44
      $region43: #{bert_self_attention.3} parent=35 // pred_region
        %v892 = vld [vmem:[#allocation3] sm:$0xff]
        %v893 = vrcp.pop %v892
        %v894 = vld [vmem:[#allocation4] sm:$0xff]
        %896 = vset.pattern.permute.xlu0 0
        %897 = vperm.xlu0 %896, %v893
        %v898 = vpop.permute.xlu0 %897
        %v900 = vmul.f32 %v894, %v898
        %v902 = vcombine.high %v900, %v900
        %v904 = vunpack.c.l.s4 1966171168
        %v905 = vunpack.c.0.s8 %v904
        %v906 = vlaneseq
        %v907 = vshrl.u32 %v906, 7
        %v908 = vsub.s32 %v905, %v907
        %v909 = vrot.slane %v900, %v908
        %v911 = vunpack.c.l.s4 1966171168
        %v912 = vunpack.c.0.s8 %v911
        %v913 = vlaneseq
        %v914 = vshrl.u32 %v913, 7
        %v915 = vsub.s32 %v912, %v914
        %v916 = vrot.slane %v902, %v915
        %v917 = vcombine.high %v909, %v909
        %v918 = vcombine.high %v916, %v916
        %v920 = vunpack.c.l.s4 1966171168
        %v921 = vunpack.c.0.s8 %v920
        %v922 = vlaneseq
        %v923 = vshrl.u32 %v922, 7
        %v924 = vsub.s32 %v921, %v923
        %v925 = vrot.slane %v909, %v924
        %v927 = vunpack.c.l.s4 1966171168
        %v928 = vunpack.c.0.s8 %v927
        %v929 = vlaneseq
        %v930 = vshrl.u32 %v929, 7
        %v931 = vsub.s32 %v928, %v930
        %v932 = vrot.slane %v916, %v931
        %v934 = vunpack.c.l.s4 1966171168
        %v935 = vunpack.c.0.s8 %v934
        %v936 = vlaneseq
        %v937 = vshrl.u32 %v936, 7
        %v938 = vsub.s32 %v935, %v937
        %v939 = vrot.slane %v917, %v938
        %v941 = vunpack.c.l.s4 1966171168
        %v942 = vunpack.c.0.s8 %v941
        %v943 = vlaneseq
        %v944 = vshrl.u32 %v943, 7
        %v945 = vsub.s32 %v942, %v944
        %v946 = vrot.slane %v918, %v945
        %v947 = vcombine.high %v925, %v925
        %v948 = vcombine.high %v932, %v932
        %v949 = vcombine.high %v939, %v939
        %v950 = vcombine.high %v946, %v946
        %vm959 = vcmask 57344
        %960 = vst.msk [vmem:[%s324] sm:$0x1] %vm959, %v925
        %961 = vst.msk [vmem:[%s324 + $0x4] sm:$0x1] %vm959, %v939
        %962 = vst.msk [vmem:[%s324 + $0x8] sm:$0x1] %vm959, %v947
        %963 = vst.msk [vmem:[%s324 + $0xc] sm:$0x1] %vm959, %v949
        %964 = vst.msk [vmem:[%s324 + $0x10] sm:$0x1] %vm959, %v932
        %965 = vst.msk [vmem:[%s324 + $0x14] sm:$0x1] %vm959, %v946
        %966 = vst.msk [vmem:[%s324 + $0x18] sm:$0x1] %vm959, %v948
        %967 = vst.msk [vmem:[%s324 + $0x1c] sm:$0x1] %vm959, %v950
        %v968 = vld [vmem:[%s553] sm:$0xff]
        %v969 = vrcp.pop %v968
        %v970 = vld [vmem:[%s561] sm:$0xff]
        %972 = vset.pattern.permute.xlu0 0
        %973 = vperm.xlu0 %972, %v969
        %v974 = vpop.permute.xlu0 %973
        %v976 = vmul.f32 %v970, %v974
        %v978 = vcombine.high %v976, %v976
        %v980 = vunpack.c.l.s4 1966171168
        %v981 = vunpack.c.0.s8 %v980
        %v982 = vlaneseq
        %v983 = vshrl.u32 %v982, 7
        %v984 = vsub.s32 %v981, %v983
        %v985 = vrot.slane %v976, %v984
        %v987 = vunpack.c.l.s4 1966171168
        %v988 = vunpack.c.0.s8 %v987
        %v989 = vlaneseq
        %v990 = vshrl.u32 %v989, 7
        %v991 = vsub.s32 %v988, %v990
        %v992 = vrot.slane %v978, %v991
        %v993 = vcombine.high %v985, %v985
        %v994 = vcombine.high %v992, %v992
        %v996 = vunpack.c.l.s4 1966171168
        %v997 = vunpack.c.0.s8 %v996
        %v998 = vlaneseq
        %v999 = vshrl.u32 %v998, 7
        %v1000 = vsub.s32 %v997, %v999
        %v1001 = vrot.slane %v985, %v1000
        %v1003 = vunpack.c.l.s4 1966171168
        %v1004 = vunpack.c.0.s8 %v1003
        %v1005 = vlaneseq
        %v1006 = vshrl.u32 %v1005, 7
        %v1007 = vsub.s32 %v1004, %v1006
        %v1008 = vrot.slane %v992, %v1007
        %v1010 = vunpack.c.l.s4 1966171168
        %v1011 = vunpack.c.0.s8 %v1010
        %v1012 = vlaneseq
        %v1013 = vshrl.u32 %v1012, 7
        %v1014 = vsub.s32 %v1011, %v1013
        %v1015 = vrot.slane %v993, %v1014
        %v1017 = vunpack.c.l.s4 1966171168
        %v1018 = vunpack.c.0.s8 %v1017
        %v1019 = vlaneseq
        %v1020 = vshrl.u32 %v1019, 7
        %v1021 = vsub.s32 %v1018, %v1020
        %v1022 = vrot.slane %v994, %v1021
        %v1023 = vcombine.high %v1001, %v1001
        %v1024 = vcombine.high %v1008, %v1008
        %v1025 = vcombine.high %v1015, %v1015
        %v1026 = vcombine.high %v1022, %v1022
        %1035 = vst.msk [vmem:[%s324 + $0x1] sm:$0x1] %vm959, %v1001
        %1036 = vst.msk [vmem:[%s324 + $0x5] sm:$0x1] %vm959, %v1015
        %1037 = vst.msk [vmem:[%s324 + $0x9] sm:$0x1] %vm959, %v1023
        %1038 = vst.msk [vmem:[%s324 + $0xd] sm:$0x1] %vm959, %v1025
        %1039 = vst.msk [vmem:[%s324 + $0x11] sm:$0x1] %vm959, %v1008
        %1040 = vst.msk [vmem:[%s324 + $0x15] sm:$0x1] %vm959, %v1022
        %1041 = vst.msk [vmem:[%s324 + $0x19] sm:$0x1] %vm959, %v1024
        %1042 = vst.msk [vmem:[%s324 + $0x1d] sm:$0x1] %vm959, %v1026
        %v1043 = vld [vmem:[%s688] sm:$0xff]
        %v1044 = vrcp.pop %v1043
        %v1045 = vld [vmem:[%s696] sm:$0xff]
        %1047 = vset.pattern.permute.xlu0 0
        %1048 = vperm.xlu0 %1047, %v1044
        %v1049 = vpop.permute.xlu0 %1048
        %v1051 = vmul.f32 %v1045, %v1049
        %v1053 = vcombine.high %v1051, %v1051
        %v1055 = vunpack.c.l.s4 1966171168
        %v1056 = vunpack.c.0.s8 %v1055
        %v1057 = vlaneseq
        %v1058 = vshrl.u32 %v1057, 7
        %v1059 = vsub.s32 %v1056, %v1058
        %v1060 = vrot.slane %v1051, %v1059
        %v1062 = vunpack.c.l.s4 1966171168
        %v1063 = vunpack.c.0.s8 %v1062
        %v1064 = vlaneseq
        %v1065 = vshrl.u32 %v1064, 7
        %v1066 = vsub.s32 %v1063, %v1065
        %v1067 = vrot.slane %v1053, %v1066
        %v1068 = vcombine.high %v1060, %v1060
        %v1069 = vcombine.high %v1067, %v1067
        %v1071 = vunpack.c.l.s4 1966171168
        %v1072 = vunpack.c.0.s8 %v1071
        %v1073 = vlaneseq
        %v1074 = vshrl.u32 %v1073, 7
        %v1075 = vsub.s32 %v1072, %v1074
        %v1076 = vrot.slane %v1060, %v1075
        %v1078 = vunpack.c.l.s4 1966171168
        %v1079 = vunpack.c.0.s8 %v1078
        %v1080 = vlaneseq
        %v1081 = vshrl.u32 %v1080, 7
        %v1082 = vsub.s32 %v1079, %v1081
        %v1083 = vrot.slane %v1067, %v1082
        %v1085 = vunpack.c.l.s4 1966171168
        %v1086 = vunpack.c.0.s8 %v1085
        %v1087 = vlaneseq
        %v1088 = vshrl.u32 %v1087, 7
        %v1089 = vsub.s32 %v1086, %v1088
        %v1090 = vrot.slane %v1068, %v1089
        %v1092 = vunpack.c.l.s4 1966171168
        %v1093 = vunpack.c.0.s8 %v1092
        %v1094 = vlaneseq
        %v1095 = vshrl.u32 %v1094, 7
        %v1096 = vsub.s32 %v1093, %v1095
        %v1097 = vrot.slane %v1069, %v1096
        %v1098 = vcombine.high %v1076, %v1076
        %v1099 = vcombine.high %v1083, %v1083
        %v1100 = vcombine.high %v1090, %v1090
        %v1101 = vcombine.high %v1097, %v1097
        %1110 = vst.msk [vmem:[%s324 + $0x2] sm:$0x1] %vm959, %v1076
        %1111 = vst.msk [vmem:[%s324 + $0x6] sm:$0x1] %vm959, %v1090
        %1112 = vst.msk [vmem:[%s324 + $0xa] sm:$0x1] %vm959, %v1098
        %1113 = vst.msk [vmem:[%s324 + $0xe] sm:$0x1] %vm959, %v1100
        %1114 = vst.msk [vmem:[%s324 + $0x12] sm:$0x1] %vm959, %v1083
        %1115 = vst.msk [vmem:[%s324 + $0x16] sm:$0x1] %vm959, %v1097
        %1116 = vst.msk [vmem:[%s324 + $0x1a] sm:$0x1] %vm959, %v1099
        %1117 = vst.msk [vmem:[%s324 + $0x1e] sm:$0x1] %vm959, %v1101
        %v1118 = vld [vmem:[%s823] sm:$0xff]
        %v1119 = vrcp.pop %v1118
        %v1120 = vld [vmem:[%s831] sm:$0xff]
        %1122 = vset.pattern.permute.xlu0 0
        %1123 = vperm.xlu0 %1122, %v1119
        %v1124 = vpop.permute.xlu0 %1123
        %v1126 = vmul.f32 %v1120, %v1124
        %v1128 = vcombine.high %v1126, %v1126
        %v1130 = vunpack.c.l.s4 1966171168
        %v1131 = vunpack.c.0.s8 %v1130
        %v1132 = vlaneseq
        %v1133 = vshrl.u32 %v1132, 7
        %v1134 = vsub.s32 %v1131, %v1133
        %v1135 = vrot.slane %v1126, %v1134
        %v1137 = vunpack.c.l.s4 1966171168
        %v1138 = vunpack.c.0.s8 %v1137
        %v1139 = vlaneseq
        %v1140 = vshrl.u32 %v1139, 7
        %v1141 = vsub.s32 %v1138, %v1140
        %v1142 = vrot.slane %v1128, %v1141
        %v1143 = vcombine.high %v1135, %v1135
        %v1144 = vcombine.high %v1142, %v1142
        %v1146 = vunpack.c.l.s4 1966171168
        %v1147 = vunpack.c.0.s8 %v1146
        %v1148 = vlaneseq
        %v1149 = vshrl.u32 %v1148, 7
        %v1150 = vsub.s32 %v1147, %v1149
        %v1151 = vrot.slane %v1135, %v1150
        %v1153 = vunpack.c.l.s4 1966171168
        %v1154 = vunpack.c.0.s8 %v1153
        %v1155 = vlaneseq
        %v1156 = vshrl.u32 %v1155, 7
        %v1157 = vsub.s32 %v1154, %v1156
        %v1158 = vrot.slane %v1142, %v1157
        %v1160 = vunpack.c.l.s4 1966171168
        %v1161 = vunpack.c.0.s8 %v1160
        %v1162 = vlaneseq
        %v1163 = vshrl.u32 %v1162, 7
        %v1164 = vsub.s32 %v1161, %v1163
        %v1165 = vrot.slane %v1143, %v1164
        %v1167 = vunpack.c.l.s4 1966171168
        %v1168 = vunpack.c.0.s8 %v1167
        %v1169 = vlaneseq
        %v1170 = vshrl.u32 %v1169, 7
        %v1171 = vsub.s32 %v1168, %v1170
        %v1172 = vrot.slane %v1144, %v1171
        %v1173 = vcombine.high %v1151, %v1151
        %v1174 = vcombine.high %v1158, %v1158
        %v1175 = vcombine.high %v1165, %v1165
        %v1176 = vcombine.high %v1172, %v1172
        %1185 = vst.msk [vmem:[%s324 + $0x3] sm:$0x1] %vm959, %v1151
        %1186 = vst.msk [vmem:[%s324 + $0x7] sm:$0x1] %vm959, %v1165
        %1187 = vst.msk [vmem:[%s324 + $0xb] sm:$0x1] %vm959, %v1173
        %1188 = vst.msk [vmem:[%s324 + $0xf] sm:$0x1] %vm959, %v1175
        %1189 = vst.msk [vmem:[%s324 + $0x13] sm:$0x1] %vm959, %v1158
        %1190 = vst.msk [vmem:[%s324 + $0x17] sm:$0x1] %vm959, %v1172
        %1191 = vst.msk [vmem:[%s324 + $0x1b] sm:$0x1] %vm959, %v1174
        %1192 = vst.msk [vmem:[%s324 + $0x1f] sm:$0x1] %vm959, %v1176
      $region44: #{bert_self_attention.3} parent=35 // pred_fallthru
        _
      %s1193 = smul.u32 8, %s21
      %p1194 = scmp.lt.s32.totalorder %s20, 1
      %s1195 = scalar_select %p1194, %s20, 1
      %p1196 = scmp.lt.s32.totalorder %s1193, 7
      %s1197 = scalar_select %p1196, %s1193, 7
      %s1198 = smul.addr %s1195, 8
      %s1199 = sadd.s32 %s1197, %s1198
      %s1200 = smul.addr %s1199, 4
      %s1201 = scalar_lea.vmem %s4, %s1200
      // Predicated region
      $region45: #{bert_self_attention.3} parent=35 // pred_check
        %p1202 = pneg %p166
      $region46: #{bert_self_attention.3} parent=35 // pred_check_branch
        %1204 = sbr.rel (%p1202) target = $region48
      $region47: #{bert_self_attention.3} parent=35 // pred_region
        %s1205 = smul.u32 8, %s21
      $region48: #{bert_self_attention.3} parent=35 // pred_fallthru
        _
    $region36: #{bert_self_attention.3} parent=5 // pred_fallthru
      _
    %p1206 = scmp.le.s32.totalorder 2, %s10
    // Predicated region
    $region49: #{bert_self_attention.3} parent=5 // pred_check
      %p1207 = pneg %p1206
    $region50: #{bert_self_attention.3} parent=5 // pred_check_branch
      %1209 = sbr.rel (%p1207) target = $region52
    $region51: #{bert_self_attention.3} parent=5 // pred_region
      %s1210 = ssub.s32 %s10, 2
      // Predicated region
      $region53: #{bert_self_attention.3} parent=51 // pred_check
        %p1211 = pneg %p172
      $region54: #{bert_self_attention.3} parent=51 // pred_check_branch
        %1213 = sbr.rel (%p1211) target = $region56
      $region55: #{bert_self_attention.3} parent=51 // pred_region
        %s1214 = smul.u32 8, %s24
        %p1215 = scmp.lt.s32.totalorder %s23, 1
        %s1216 = scalar_select %p1215, %s23, 1
        %p1217 = scmp.lt.s32.totalorder %s1214, 7
        %s1218 = scalar_select %p1217, %s1214, 7
        %s1219 = smul.addr %s1216, 8
        %s1220 = sadd.s32 %s1218, %s1219
        %s1221 = smul.addr %s1220, 4
        %s1222 = scalar_lea.vmem %s4, %s1221
      $region56: #{bert_self_attention.3} parent=51 // pred_fallthru
        _
    $region52: #{bert_self_attention.3} parent=5 // pred_fallthru
      _
  $region6: #{bert_self_attention.3} parent=0 // loop_footer
    %s14 = sadd.s32 1, %s10
  $region7: #{bert_self_attention.3} parent=0 // loop_footer_branch
    %9 = sbr.rel target = $region3
  $region8: #{bert_self_attention.3} parent=0 // loop_exit
    _

</llo_original>
